<compile_context>
chip_gen: v6e
topology: v6e:2x2x1
jax: 0.10.0
libtpu: 0.0.40
codegen_flags: <defaults>
</compile_context>

<pallas_src>
import jax
import jax.numpy as jnp
from jax import lax
from jax.experimental import pallas as pl
from jax.experimental.pallas import tpu as pltpu

# ----------------------------- configuration --------------------------------
N = 2              # batch
C_IN = 16          # in_channels
C_OUT = 16         # out_channels (== in_channels -> down() is identity)
COFF = 4           # coff_embedding
R = C_OUT // COFF  # inter_channels = 4
T = 8              # temporal frames
V = 16             # graph vertices
S = 3              # num_subset
CT = C_IN * T      # 128  (lane-dense)
OT = C_OUT * T     # 128
RT = R * T         # 32
SRT = S * RT       # 96
NV = N * V         # 32
BN_EPS = 1e-5


# ------------------------------- kernel -------------------------------------
def unit_gcn_kernel(x_ref,     # (NV, CT)        x^T : x[n,c,t,v] -> x_ref[n*V+v, c*T+t]
                    wab_ref,   # (CT, 2*S*RT)    conv_a|conv_b weights, all subsets
                    bab_ref,   # (1, 2*S*RT)     matching biases
                    mask_ref,  # (NV, S*NV)      additive cross-batch softmax mask
                    abd_ref,   # (NV, S*NV)      block-diag (A + PA), subsets lane-concat
                    wd_ref,    # (S*CT, OT)      conv_d weights stacked on contraction axis
                    bns_ref,   # (1, OT)         folded BN scale
                    bnb_ref,   # (1, OT)         folded BN shift (+ summed conv_d biases)
                    o_ref):    # (NV, OT)
    xt = x_ref[...].astype(jnp.float32)                        # (32, 128)

    # Fused conv_a / conv_b over all subsets: one (32,128)@(128,192) MXU matmul.
    fab = jnp.dot(xt, wab_ref[...], preferred_element_type=jnp.float32) + bab_ref[...]

    # Per-subset attention logits over both batches at once:
    # m_i[v1g, v2g] = sum_k fa_i[v1g, k] * fb_i[v2g, k]
    logits = []
    for i in range(S):                                         # unrolled (S = 3)
        fa_i = fab[:, i * RT:(i + 1) * RT]                     # (32, 32)
        fb_i = fab[:, SRT + i * RT: SRT + (i + 1) * RT]        # (32, 32)
        logits.append(lax.dot_general(fa_i, fb_i, (((1,), (1,)), ((), ())),
                                      preferred_element_type=jnp.float32))

    # Batched softmax (dim -2, i.e. the sublane axis) over all subsets at once.
    m = jnp.concatenate(logits, axis=1) * (1.0 / float(RT)) + mask_ref[...]   # (32, 96)
    m_max = jnp.max(m, axis=0, keepdims=True)
    e = jnp.exp(m - m_max)
    attn = e / jnp.sum(e, axis=0, keepdims=True)
    aeff = attn + abd_ref[...]                                 # (32, 96), block-diag

    # Per-subset graph aggregation: zt_i[v2g, k] = sum_{v1g} aeff_i[v1g, v2g]*xt[v1g, k]
    zts = []
    for i in range(S):
        a_i = aeff[:, i * NV:(i + 1) * NV]                     # (32, 32)
        zts.append(lax.dot_general(a_i, xt, (((0,), (0,)), ((), ())),
                                   preferred_element_type=jnp.float32))       # (32, 128)
    zcat = jnp.concatenate(zts, axis=1)                        # (32, 384), lane-aligned

    # Fused conv_d: single matmul, 384-deep contraction accumulates over subsets.
    y = jnp.dot(zcat, wd_ref[...], preferred_element_type=jnp.float32)        # (32, 128)

    # BatchNorm (folded, incl. conv_d biases) + identity residual + ReLU.
    y = y * bns_ref[...] + bnb_ref[...] + xt
    o_ref[...] = jnp.maximum(y, 0.0).astype(o_ref.dtype)


# ------------------------------- wrapper -------------------------------------
@jax.jit
def unit_gcn_pallas(x, A, PA, wa, ba, wb, bb, wd, bd,
                    bn_gamma, bn_beta, bn_mean, bn_var):
    n = x.shape[0]
    nv = n * V
    eye_t = jnp.eye(T, dtype=jnp.float32)

    # Lane-dense input layout: (N*V, C*T)
    xt = jnp.transpose(x, (0, 3, 1, 2)).reshape(nv, CT)

    # Expand 1x1-conv weights to block-diagonal-over-T (so the kernel only does
    # plain row-major matmuls):  W_exp[i, c*T+t, o*T+u] = w[i, o, c] * delta(t, u)
    def expand_w(w, cin, cout):
        return jnp.einsum('ioc,tu->ictou', w, eye_t).reshape(S, cin * T, cout * T)

    wa_e = expand_w(wa, C_IN, R)        # (S, CT, RT)
    wb_e = expand_w(wb, C_IN, R)
    wd_e = expand_w(wd, C_IN, C_OUT)    # (S, CT, OT)

    # conv_a | conv_b fused across subsets: (CT, 2*S*RT) = (128, 192)
    wab = jnp.concatenate(
        [jnp.transpose(wa_e, (1, 0, 2)).reshape(CT, SRT),
         jnp.transpose(wb_e, (1, 0, 2)).reshape(CT, SRT)], axis=1)
    bab = jnp.concatenate(
        [jnp.repeat(ba, T, axis=1).reshape(1, SRT),
         jnp.repeat(bb, T, axis=1).reshape(1, SRT)], axis=1)           # (1, 192)

    # conv_d fused across subsets along the contraction axis: (S*CT, OT) = (384, 128)
    wd_stack = wd_e.reshape(S * CT, OT)

    # A + PA, tiled block-diagonally over batch, subsets lane-concatenated.
    a_sum = A + PA                                                      # (S, V, V)
    eye_n = jnp.eye(n, dtype=jnp.float32)
    a_bd = jnp.einsum('nm,svw->snvmw', eye_n, a_sum).reshape(S, nv, nv)
    abd = jnp.transpose(a_bd, (1, 0, 2)).reshape(nv, S * nv)            # (32, 96)

    # Additive cross-batch mask: 0 on same-batch blocks, -1e30 elsewhere.
    blk = jnp.kron(eye_n, jnp.ones((V, V), jnp.float32))
    mask = jnp.tile((1.0 - blk) * (-1e30), (1, S))                      # (32, 96)

    # Fold eval-mode BN and the summed conv_d biases into per-channel scale/shift.
    scale = bn_gamma / jnp.sqrt(bn_var + BN_EPS)
    shift = bn_beta - bn_mean * scale + scale * jnp.sum(bd, axis=0)
    bns = jnp.repeat(scale, T).reshape(1, OT)
    bnb = jnp.repeat(shift, T).reshape(1, OT)

    grid_spec = pltpu.PrefetchScalarGridSpec(
        num_scalar_prefetch=0,
        grid=(1,),                                   # whole problem in one step
        in_specs=[
            pl.BlockSpec((nv, CT),        lambda i: (0, 0)),
            pl.BlockSpec((CT, 2 * SRT),   lambda i: (0, 0)),
            pl.BlockSpec((1, 2 * SRT),    lambda i: (0, 0)),
            pl.BlockSpec((nv, S * nv),    lambda i: (0, 0)),
            pl.BlockSpec((nv, S * nv),    lambda i: (0, 0)),
            pl.BlockSpec((S * CT, OT),    lambda i: (0, 0)),
            pl.BlockSpec((1, OT),         lambda i: (0, 0)),
            pl.BlockSpec((1, OT),         lambda i: (0, 0)),
        ],
        out_specs=pl.BlockSpec((nv, OT),  lambda i: (0, 0)),
    )
    out_t = pl.pallas_call(
        unit_gcn_kernel,
        out_shape=jax.ShapeDtypeStruct((nv, OT), x.dtype),
        grid_spec=grid_spec,
        compiler_params=pltpu.CompilerParams(
            dimension_semantics=("arbitrary",)),
    )(xt, wab, bab, mask, abd, wd_stack, bns, bnb)

    # (N*V, C_OUT*T) -> (N, C_OUT, T, V)
    return jnp.transpose(out_t.reshape(n, V, C_OUT, T), (0, 2, 3, 1))


# --------------------------- pure-JAX reference -------------------------------
def unit_gcn_ref(x, A, PA, wa, ba, wb, bb, wd, bd,
                 bn_gamma, bn_beta, bn_mean, bn_var):
    n, c, t, v = x.shape
    hp = lax.Precision.HIGHEST
    a_all = A + PA
    y = jnp.zeros((n, C_OUT, t, v), jnp.float32)
    for i in range(S):
        fa = jnp.einsum('rc,nctv->nrtv', wa[i], x, precision=hp) \
            + ba[i][None, :, None, None]
        fb = jnp.einsum('rc,nctv->nrtv', wb[i], x, precision=hp) \
            + bb[i][None, :, None, None]
        a1 = jnp.transpose(fa, (0, 3, 1, 2)).reshape(n, v, R * t)
        a2 = fb.reshape(n, R * t, v)
        m = jnp.matmul(a1, a2, precision=hp) / float(R * t)
        m_max = jnp.max(m, axis=-2, keepdims=True)
        e = jnp.exp(m - m_max)
        attn = e / jnp.sum(e, axis=-2, keepdims=True)       # softmax over dim -2
        a_eff = attn + a_all[i][None]
        z = jnp.matmul(x.reshape(n, c * t, v), a_eff, precision=hp).reshape(n, c, t, v)
        y = y + jnp.einsum('oc,nctv->notv', wd[i], z, precision=hp) \
            + bd[i][None, :, None, None]
    scale = bn_gamma / jnp.sqrt(bn_var + BN_EPS)
    shift = bn_beta - bn_mean * scale
    y = y * scale[None, :, None, None] + shift[None, :, None, None]
    y = y + x                                               # down(x) = x (Cin == Cout)
    return jnp.maximum(y, 0.0)


# --------------------------------- main ---------------------------------------
if __name__ == "__main__":
    key = jax.random.PRNGKey(0)
    ks = jax.random.split(key, 12)

    x = jax.random.normal(ks[0], (N, C_IN, T, V), dtype=jnp.float32)
    A = jax.random.uniform(ks[1], (S, V, V), dtype=jnp.float32) * (2.0 / V)
    PA = jnp.full((S, V, V), 1e-6, dtype=jnp.float32)        # PA init = 1e-6 (as in module)
    wa = jax.random.normal(ks[2], (S, R, C_IN), dtype=jnp.float32) * 0.2
    ba = jax.random.normal(ks[3], (S, R), dtype=jnp.float32) * 0.1
    wb = jax.random.normal(ks[4], (S, R, C_IN), dtype=jnp.float32) * 0.2
    bb = jax.random.normal(ks[5], (S, R), dtype=jnp.float32) * 0.1
    wd = jax.random.normal(ks[6], (S, C_OUT, C_IN), dtype=jnp.float32) * 0.2
    bd = jax.random.normal(ks[7], (S, C_OUT), dtype=jnp.float32) * 0.1
    bn_gamma = 1.0 + 0.1 * jax.random.normal(ks[8], (C_OUT,), dtype=jnp.float32)
    bn_beta = 0.1 * jax.random.normal(ks[9], (C_OUT,), dtype=jnp.float32)
    bn_mean = 0.1 * jax.random.normal(ks[10], (C_OUT,), dtype=jnp.float32)
    bn_var = 1.0 + 0.1 * jax.random.uniform(ks[11], (C_OUT,), dtype=jnp.float32)

    out = jax.block_until_ready(
        unit_gcn_pallas(x, A, PA, wa, ba, wb, bb, wd, bd,
                        bn_gamma, bn_beta, bn_mean, bn_var))
    ref = jax.block_until_ready(
        unit_gcn_ref(x, A, PA, wa, ba, wb, bb, wd, bd,
                     bn_gamma, bn_beta, bn_mean, bn_var))

    assert out.shape == ref.shape == (N, C_OUT, T, V)
    err = jnp.max(jnp.abs(out - ref))
    assert jnp.allclose(out, ref, rtol=2e-3, atol=2e-3), f"max abs diff {err}"
    print("KERNEL_OK")
</pallas_src>

<mosaic_0001>
module attributes {stable_mosaic.version = 11 : i64} {
  func.func @unit_gcn_kernel(%arg0: i32, %arg1: memref<32x128xf32, #tpu.memory_space<vmem>>, %arg2: memref<128x192xf32, #tpu.memory_space<vmem>>, %arg3: memref<1x192xf32, #tpu.memory_space<vmem>>, %arg4: memref<32x96xf32, #tpu.memory_space<vmem>>, %arg5: memref<32x96xf32, #tpu.memory_space<vmem>>, %arg6: memref<384x128xf32, #tpu.memory_space<vmem>>, %arg7: memref<1x128xf32, #tpu.memory_space<vmem>>, %arg8: memref<1x128xf32, #tpu.memory_space<vmem>>, %arg9: memref<32x128xf32, #tpu.memory_space<vmem>>) attributes {dimension_semantics = [#tpu.dimension_semantics<arbitrary>], iteration_bounds = array<i64: 1>, scalar_prefetch = 0 : i64, scratch_operands = 0 : i64, tpu.core_type = #tpu.core_type<tc>, window_params = [{pipeline_mode = #tpu.pipeline_mode<synchronous>, transform_indices = @transform_0, window_bounds = array<i64: 32, 128>}, {pipeline_mode = #tpu.pipeline_mode<synchronous>, transform_indices = @transform_1, window_bounds = array<i64: 128, 192>}, {pipeline_mode = #tpu.pipeline_mode<synchronous>, transform_indices = @transform_2, window_bounds = array<i64: 1, 192>}, {pipeline_mode = #tpu.pipeline_mode<synchronous>, transform_indices = @transform_3, window_bounds = array<i64: 32, 96>}, {pipeline_mode = #tpu.pipeline_mode<synchronous>, transform_indices = @transform_4, window_bounds = array<i64: 32, 96>}, {pipeline_mode = #tpu.pipeline_mode<synchronous>, transform_indices = @transform_5, window_bounds = array<i64: 384, 128>}, {pipeline_mode = #tpu.pipeline_mode<synchronous>, transform_indices = @transform_6, window_bounds = array<i64: 1, 128>}, {pipeline_mode = #tpu.pipeline_mode<synchronous>, transform_indices = @transform_7, window_bounds = array<i64: 1, 128>}, {pipeline_mode = #tpu.pipeline_mode<synchronous>, transform_indices = @transform_8, window_bounds = array<i64: 32, 128>}]} {
    %c0 = arith.constant 0 : index
    %c0_0 = arith.constant 0 : index
    %0 = vector.load %arg1[%c0, %c0_0] : memref<32x128xf32, #tpu.memory_space<vmem>>, vector<32x128xf32>
    %c0_1 = arith.constant 0 : index
    %c0_2 = arith.constant 0 : index
    %1 = vector.load %arg2[%c0_1, %c0_2] : memref<128x192xf32, #tpu.memory_space<vmem>>, vector<128x192xf32>
    %cst = arith.constant dense<0.000000e+00> : vector<32x192xf32>
    %2 = tpu.matmul %0, %1, %cst {dimension_numbers = #tpu.dot_dimension_numbers<[1], [0], [0], [1], [0, 0, 1, 1], [], []>} : vector<32x128xf32>, vector<128x192xf32>, vector<32x192xf32> -> vector<32x192xf32>
    %c0_3 = arith.constant 0 : index
    %c0_4 = arith.constant 0 : index
    %3 = vector.load %arg3[%c0_3, %c0_4] : memref<1x192xf32, #tpu.memory_space<vmem>>, vector<1x192xf32>
    %4 = vector.broadcast %3 : vector<1x192xf32> to vector<32x192xf32>
    %5 = arith.addf %2, %4 : vector<32x192xf32>
    %6 = vector.extract_strided_slice %5 {offsets = [0, 0], sizes = [32, 32], strides = [1, 1]} : vector<32x192xf32> to vector<32x32xf32>
    %7 = vector.extract_strided_slice %5 {offsets = [0, 96], sizes = [32, 32], strides = [1, 1]} : vector<32x192xf32> to vector<32x32xf32>
    %cst_5 = arith.constant dense<0.000000e+00> : vector<32x32xf32>
    %8 = tpu.matmul %6, %7, %cst_5 {dimension_numbers = #tpu.dot_dimension_numbers<[1], [1], [0], [0], [0, 0, 1, 0], [], []>} : vector<32x32xf32>, vector<32x32xf32>, vector<32x32xf32> -> vector<32x32xf32>
    %9 = vector.extract_strided_slice %5 {offsets = [0, 32], sizes = [32, 32], strides = [1, 1]} : vector<32x192xf32> to vector<32x32xf32>
    %10 = vector.extract_strided_slice %5 {offsets = [0, 128], sizes = [32, 32], strides = [1, 1]} : vector<32x192xf32> to vector<32x32xf32>
    %cst_6 = arith.constant dense<0.000000e+00> : vector<32x32xf32>
    %11 = tpu.matmul %9, %10, %cst_6 {dimension_numbers = #tpu.dot_dimension_numbers<[1], [1], [0], [0], [0, 0, 1, 0], [], []>} : vector<32x32xf32>, vector<32x32xf32>, vector<32x32xf32> -> vector<32x32xf32>
    %12 = vector.extract_strided_slice %5 {offsets = [0, 64], sizes = [32, 32], strides = [1, 1]} : vector<32x192xf32> to vector<32x32xf32>
    %13 = vector.extract_strided_slice %5 {offsets = [0, 160], sizes = [32, 32], strides = [1, 1]} : vector<32x192xf32> to vector<32x32xf32>
    %cst_7 = arith.constant dense<0.000000e+00> : vector<32x32xf32>
    %14 = tpu.matmul %12, %13, %cst_7 {dimension_numbers = #tpu.dot_dimension_numbers<[1], [1], [0], [0], [0, 0, 1, 0], [], []>} : vector<32x32xf32>, vector<32x32xf32>, vector<32x32xf32> -> vector<32x32xf32>
    %15 = tpu.concatenate %8, %11, %14 in 1 : vector<32x32xf32>, vector<32x32xf32>, vector<32x32xf32> -> vector<32x96xf32>
    %cst_8 = arith.constant 3.125000e-02 : f32
    %16 = vector.broadcast %cst_8 : f32 to vector<32x96xf32>
    %17 = arith.mulf %15, %16 : vector<32x96xf32>
    %c0_9 = arith.constant 0 : index
    %c0_10 = arith.constant 0 : index
    %18 = vector.load %arg4[%c0_9, %c0_10] : memref<32x96xf32, #tpu.memory_space<vmem>>, vector<32x96xf32>
    %19 = arith.addf %17, %18 : vector<32x96xf32>
    %cst_11 = arith.constant dense<0xFF800000> : vector<96xf32>
    %20 = vector.multi_reduction <maximumf>, %19, %cst_11 [0] : vector<32x96xf32> to vector<96xf32>
    %21 = vector.shape_cast %20 : vector<96xf32> to vector<1x96xf32>
    %22 = vector.broadcast %21 : vector<1x96xf32> to vector<32x96xf32>
    %23 = arith.subf %19, %22 : vector<32x96xf32>
    %24 = math.exp %23 : vector<32x96xf32>
    %cst_12 = arith.constant dense<0.000000e+00> : vector<96xf32>
    %25 = vector.multi_reduction <add>, %24, %cst_12 [0] : vector<32x96xf32> to vector<96xf32>
    %26 = vector.shape_cast %25 : vector<96xf32> to vector<1x96xf32>
    %27 = vector.broadcast %26 : vector<1x96xf32> to vector<32x96xf32>
    %28 = arith.divf %24, %27 : vector<32x96xf32>
    %c0_13 = arith.constant 0 : index
    %c0_14 = arith.constant 0 : index
    %29 = vector.load %arg5[%c0_13, %c0_14] : memref<32x96xf32, #tpu.memory_space<vmem>>, vector<32x96xf32>
    %30 = arith.addf %28, %29 : vector<32x96xf32>
    %31 = vector.extract_strided_slice %30 {offsets = [0, 0], sizes = [32, 32], strides = [1, 1]} : vector<32x96xf32> to vector<32x32xf32>
    %cst_15 = arith.constant dense<0.000000e+00> : vector<32x128xf32>
    %32 = tpu.matmul %31, %0, %cst_15 {dimension_numbers = #tpu.dot_dimension_numbers<[0], [0], [1], [1], [0, 1, 1, 1], [], []>} : vector<32x32xf32>, vector<32x128xf32>, vector<32x128xf32> -> vector<32x128xf32>
    %33 = vector.extract_strided_slice %30 {offsets = [0, 32], sizes = [32, 32], strides = [1, 1]} : vector<32x96xf32> to vector<32x32xf32>
    %cst_16 = arith.constant dense<0.000000e+00> : vector<32x128xf32>
    %34 = tpu.matmul %33, %0, %cst_16 {dimension_numbers = #tpu.dot_dimension_numbers<[0], [0], [1], [1], [0, 1, 1, 1], [], []>} : vector<32x32xf32>, vector<32x128xf32>, vector<32x128xf32> -> vector<32x128xf32>
    %35 = vector.extract_strided_slice %30 {offsets = [0, 64], sizes = [32, 32], strides = [1, 1]} : vector<32x96xf32> to vector<32x32xf32>
    %cst_17 = arith.constant dense<0.000000e+00> : vector<32x128xf32>
    %36 = tpu.matmul %35, %0, %cst_17 {dimension_numbers = #tpu.dot_dimension_numbers<[0], [0], [1], [1], [0, 1, 1, 1], [], []>} : vector<32x32xf32>, vector<32x128xf32>, vector<32x128xf32> -> vector<32x128xf32>
    %37 = tpu.concatenate %32, %34, %36 in 1 : vector<32x128xf32>, vector<32x128xf32>, vector<32x128xf32> -> vector<32x384xf32>
    %c0_18 = arith.constant 0 : index
    %c0_19 = arith.constant 0 : index
    %38 = vector.load %arg6[%c0_18, %c0_19] : memref<384x128xf32, #tpu.memory_space<vmem>>, vector<384x128xf32>
    %cst_20 = arith.constant dense<0.000000e+00> : vector<32x128xf32>
    %39 = tpu.matmul %37, %38, %cst_20 {dimension_numbers = #tpu.dot_dimension_numbers<[1], [0], [0], [1], [0, 0, 1, 1], [], []>} : vector<32x384xf32>, vector<384x128xf32>, vector<32x128xf32> -> vector<32x128xf32>
    %c0_21 = arith.constant 0 : index
    %c0_22 = arith.constant 0 : index
    %40 = vector.load %arg7[%c0_21, %c0_22] : memref<1x128xf32, #tpu.memory_space<vmem>>, vector<1x128xf32>
    %41 = vector.broadcast %40 : vector<1x128xf32> to vector<32x128xf32>
    %42 = arith.mulf %39, %41 : vector<32x128xf32>
    %c0_23 = arith.constant 0 : index
    %c0_24 = arith.constant 0 : index
    %43 = vector.load %arg8[%c0_23, %c0_24] : memref<1x128xf32, #tpu.memory_space<vmem>>, vector<1x128xf32>
    %44 = vector.broadcast %43 : vector<1x128xf32> to vector<32x128xf32>
    %45 = arith.addf %42, %44 : vector<32x128xf32>
    %46 = arith.addf %45, %0 : vector<32x128xf32>
    %cst_25 = arith.constant 0.000000e+00 : f32
    %47 = vector.broadcast %cst_25 : f32 to vector<32x128xf32>
    %48 = arith.maximumf %46, %47 : vector<32x128xf32>
    %c0_26 = arith.constant 0 : index
    %c0_27 = arith.constant 0 : index
    %49 = vector.load %arg9[%c0_26, %c0_27] : memref<32x128xf32, #tpu.memory_space<vmem>>, vector<32x128xf32>
    tpu.vector_store %arg9[%c0_26, %c0_27], %48 {strides = array<i32>} : memref<32x128xf32, #tpu.memory_space<vmem>>, vector<32x128xf32>,
    return
  }
  func.func @transform_0(%arg0: i32) -> (i32, i32) {
    %c0_i32 = arith.constant 0 : i32
    %c0_i32_0 = arith.constant 0 : i32
    %c0_i32_1 = arith.constant 0 : i32
    return %c0_i32, %c0_i32_0 : i32, i32
  }
  func.func @transform_1(%arg0: i32) -> (i32, i32) {
    %c0_i32 = arith.constant 0 : i32
    %c0_i32_0 = arith.constant 0 : i32
    %c0_i32_1 = arith.constant 0 : i32
    return %c0_i32, %c0_i32_0 : i32, i32
  }
  func.func @transform_2(%arg0: i32) -> (i32, i32) {
    %c0_i32 = arith.constant 0 : i32
    %c0_i32_0 = arith.constant 0 : i32
    %c0_i32_1 = arith.constant 0 : i32
    return %c0_i32, %c0_i32_0 : i32, i32
  }
  func.func @transform_3(%arg0: i32) -> (i32, i32) {
    %c0_i32 = arith.constant 0 : i32
    %c0_i32_0 = arith.constant 0 : i32
    %c0_i32_1 = arith.constant 0 : i32
    return %c0_i32, %c0_i32_0 : i32, i32
  }
  func.func @transform_4(%arg0: i32) -> (i32, i32) {
    %c0_i32 = arith.constant 0 : i32
    %c0_i32_0 = arith.constant 0 : i32
    %c0_i32_1 = arith.constant 0 : i32
    return %c0_i32, %c0_i32_0 : i32, i32
  }
  func.func @transform_5(%arg0: i32) -> (i32, i32) {
    %c0_i32 = arith.constant 0 : i32
    %c0_i32_0 = arith.constant 0 : i32
    %c0_i32_1 = arith.constant 0 : i32
    return %c0_i32, %c0_i32_0 : i32, i32
  }
  func.func @transform_6(%arg0: i32) -> (i32, i32) {
    %c0_i32 = arith.constant 0 : i32
    %c0_i32_0 = arith.constant 0 : i32
    %c0_i32_1 = arith.constant 0 : i32
    return %c0_i32, %c0_i32_0 : i32, i32
  }
  func.func @transform_7(%arg0: i32) -> (i32, i32) {
    %c0_i32 = arith.constant 0 : i32
    %c0_i32_0 = arith.constant 0 : i32
    %c0_i32_1 = arith.constant 0 : i32
    return %c0_i32, %c0_i32_0 : i32, i32
  }
  func.func @transform_8(%arg0: i32) -> (i32, i32) {
    %c0_i32 = arith.constant 0 : i32
    %c0_i32_0 = arith.constant 0 : i32
    %c0_i32_1 = arith.constant 0 : i32
    return %c0_i32, %c0_i32_0 : i32, i32
  }
}

</mosaic_0001>

<llo_original>
// kernel: unit_gcn_pallas.1
$region0: #{unit_gcn_pallas.1}
  #allocation0 [shape = 'u32[]', space=smem, size = 0x4, offset = 0x4, fixed_abs, tag = 'smem constant byte address 0x4 - core index']
  #allocation1 [shape = 'u32[144,128]{1,0:T(1,128)}', space=vmem, size = 0x12000, scoped, tag = 'internal scratch']
  %s0 = inlined_call_operand.vmem [shape: f32[32,128], index: 0, kind: input, shape index: {}]
  %s1 = inlined_call_operand.vmem [shape: f32[128,192], index: 1, kind: input, shape index: {}]
  %s2 = inlined_call_operand.vmem [shape: f32[1,192], index: 2, kind: input, shape index: {}]
  %s3 = inlined_call_operand.vmem [shape: f32[32,96], index: 3, kind: input, shape index: {}]
  %s4 = inlined_call_operand.vmem [shape: f32[32,96], index: 4, kind: input, shape index: {}]
  %s5 = inlined_call_operand.vmem [shape: f32[384,128], index: 5, kind: input, shape index: {}]
  %s6 = inlined_call_operand.vmem [shape: f32[1,128], index: 6, kind: input, shape index: {}]
  %s7 = inlined_call_operand.vmem [shape: f32[1,128], index: 7, kind: input, shape index: {}]
  %s8 = inlined_call_operand.vmem [shape: f32[32,128], index: 8, kind: output, shape index: {}]
  %s9 = sld [smem:[#allocation0]]
  $region42: #{unit_gcn_pallas.1} parent=0
    _
  %s11 = ssub.s32 1, %s9
  %s12 = scalar_select 0, %s11, %s9
  // Predicated region
  $region2: #{unit_gcn_pallas.1} parent=0 // pred_check
    _
  $region3: #{unit_gcn_pallas.1} parent=0 // pred_check_branch
    %14 = sbr.rel (0) target = $region5
  $region4: #{unit_gcn_pallas.1} parent=0 // pred_region
    _
  $region5: #{unit_gcn_pallas.1} parent=0 // pred_fallthru
    _
  // Predicated region
  $region6: #{unit_gcn_pallas.1} parent=0 // pred_check
    _
  $region7: #{unit_gcn_pallas.1} parent=0 // pred_check_branch
    %16 = sbr.rel (0) target = $region9
  $region8: #{unit_gcn_pallas.1} parent=0 // pred_region
    _
  $region9: #{unit_gcn_pallas.1} parent=0 // pred_fallthru
    _
  // Predicated region
  $region10: #{unit_gcn_pallas.1} parent=0 // pred_check
    _
  $region11: #{unit_gcn_pallas.1} parent=0 // pred_check_branch
    %18 = sbr.rel (0) target = $region13
  $region12: #{unit_gcn_pallas.1} parent=0 // pred_region
    _
  $region13: #{unit_gcn_pallas.1} parent=0 // pred_fallthru
    _
  // Predicated region
  $region14: #{unit_gcn_pallas.1} parent=0 // pred_check
    _
  $region15: #{unit_gcn_pallas.1} parent=0 // pred_check_branch
    %20 = sbr.rel (0) target = $region17
  $region16: #{unit_gcn_pallas.1} parent=0 // pred_region
    _
  $region17: #{unit_gcn_pallas.1} parent=0 // pred_fallthru
    _
  // Predicated region
  $region18: #{unit_gcn_pallas.1} parent=0 // pred_check
    _
  $region19: #{unit_gcn_pallas.1} parent=0 // pred_check_branch
    %22 = sbr.rel (0) target = $region21
  $region20: #{unit_gcn_pallas.1} parent=0 // pred_region
    _
  $region21: #{unit_gcn_pallas.1} parent=0 // pred_fallthru
    _
  // Predicated region
  $region22: #{unit_gcn_pallas.1} parent=0 // pred_check
    _
  $region23: #{unit_gcn_pallas.1} parent=0 // pred_check_branch
    %24 = sbr.rel (0) target = $region25
  $region24: #{unit_gcn_pallas.1} parent=0 // pred_region
    _
  $region25: #{unit_gcn_pallas.1} parent=0 // pred_fallthru
    _
  // Predicated region
  $region26: #{unit_gcn_pallas.1} parent=0 // pred_check
    _
  $region27: #{unit_gcn_pallas.1} parent=0 // pred_check_branch
    %26 = sbr.rel (0) target = $region29
  $region28: #{unit_gcn_pallas.1} parent=0 // pred_region
    _
  $region29: #{unit_gcn_pallas.1} parent=0 // pred_fallthru
    _
  // Predicated region
  $region30: #{unit_gcn_pallas.1} parent=0 // pred_check
    _
  $region31: #{unit_gcn_pallas.1} parent=0 // pred_check_branch
    %28 = sbr.rel (0) target = $region33
  $region32: #{unit_gcn_pallas.1} parent=0 // pred_region
    _
  $region33: #{unit_gcn_pallas.1} parent=0 // pred_fallthru
    _
  %v29 = vld [vmem:[%s0] sm:$0xff]
  %v30 = vld [vmem:[%s0 + $0x8] sm:$0xff]
  %v31 = vld [vmem:[%s0 + $0x10] sm:$0xff]
  %v32 = vld [vmem:[%s0 + $0x18] sm:$0xff]
  %v33 = vld [vmem:[%s1] sm:$0xff]
  %v34 = vld [vmem:[%s1 + $0x8] sm:$0xff]
  %v35 = vld [vmem:[%s1 + $0x10] sm:$0xff]
  %v36 = vld [vmem:[%s1 + $0x18] sm:$0xff]
  %v37 = vld [vmem:[%s1 + $0x20] sm:$0xff]
  %v38 = vld [vmem:[%s1 + $0x28] sm:$0xff]
  %v39 = vld [vmem:[%s1 + $0x30] sm:$0xff]
  %v40 = vld [vmem:[%s1 + $0x38] sm:$0xff]
  %v41 = vld [vmem:[%s1 + $0x40] sm:$0xff]
  %v42 = vld [vmem:[%s1 + $0x48] sm:$0xff]
  %v43 = vld [vmem:[%s1 + $0x50] sm:$0xff]
  %v44 = vld [vmem:[%s1 + $0x58] sm:$0xff]
  %v45 = vld [vmem:[%s1 + $0x60] sm:$0xff]
  %v46 = vld [vmem:[%s1 + $0x68] sm:$0xff]
  %v47 = vld [vmem:[%s1 + $0x70] sm:$0xff]
  %v48 = vld [vmem:[%s1 + $0x78] sm:$0xff]
  %v49 = vld [vmem:[%s1 + $0x80] sm:$0xff]
  %v50 = vld [vmem:[%s1 + $0x88] sm:$0xff]
  %v51 = vld [vmem:[%s1 + $0x90] sm:$0xff]
  %v52 = vld [vmem:[%s1 + $0x98] sm:$0xff]
  %v53 = vld [vmem:[%s1 + $0xa0] sm:$0xff]
  %v54 = vld [vmem:[%s1 + $0xa8] sm:$0xff]
  %v55 = vld [vmem:[%s1 + $0xb0] sm:$0xff]
  %v56 = vld [vmem:[%s1 + $0xb8] sm:$0xff]
  %v57 = vld [vmem:[%s1 + $0xc0] sm:$0xff]
  %v58 = vld [vmem:[%s1 + $0xc8] sm:$0xff]
  %v59 = vld [vmem:[%s1 + $0xd0] sm:$0xff]
  %v60 = vld [vmem:[%s1 + $0xd8] sm:$0xff]
  %v61 = vld [vmem:[%s1 + $0xe0] sm:$0xff]
  %v62 = vld [vmem:[%s1 + $0xe8] sm:$0xff]
  %v63 = vld [vmem:[%s1 + $0xf0] sm:$0xff]
  %v64 = vld [vmem:[%s1 + $0xf8] sm:$0xff]
  %v65 = vld [vmem:[%s2] sm:$0x3]
  %v67 = vlaneseq
  %v68 = vshrl.u32 %v67, 7
  %v69 = vsub.s32 0, %v68
  %v70 = vrot.slane %v65, %v69
  %v71 = vlaneseq
  %v72 = vshrl.u32 %v71, 7
  %v73 = vsub.s32 1, %v72
  %v74 = vrot.slane %v65, %v73
  %77 = vmatprep.subr.mxu0 %v64
  %78 = vmatpush1.msra.mxu0 %v63
  %79 = vmatprep.subr.mxu0 %v62
  %80 = vmatpush1.msra.mxu0 %v61
  %81 = vmatprep.subr.mxu0 %v60
  %82 = vmatpush1.msra.mxu0 %v59
  %83 = vmatprep.subr.mxu0 %v58
  %84 = vmatpush1.msra.mxu0 %v57
  %85 = vmatprep.subr.mxu0 %v56
  %86 = vmatpush1.msra.mxu0 %v55
  %87 = vmatprep.subr.mxu0 %v54
  %88 = vmatpush1.msra.mxu0 %v53
  %89 = vmatprep.subr.mxu0 %v52
  %90 = vmatpush1.msra.mxu0 %v51
  %91 = vmatprep.subr.mxu0 %v50
  %92 = vmatpush1.msra.mxu0 %v49
  %93 = vmatprep.subr.mxu0 %v48
  %94 = vmatpush1.msra.mxu0 %v47
  %95 = vmatprep.subr.mxu0 %v46
  %96 = vmatpush1.msra.mxu0 %v45
  %97 = vmatprep.subr.mxu0 %v44
  %98 = vmatpush1.msra.mxu0 %v43
  %99 = vmatprep.subr.mxu0 %v42
  %100 = vmatpush1.msra.mxu0 %v41
  %101 = vmatprep.subr.mxu0 %v40
  %102 = vmatpush1.msra.mxu0 %v39
  %103 = vmatprep.subr.mxu0 %v38
  %104 = vmatpush1.msra.mxu0 %v37
  %105 = vmatprep.subr.mxu0 %v36
  %106 = vmatpush1.msra.mxu0 %v35
  %107 = vmatprep.subr.mxu0 %v34
  %108 = vmatpush1.msra.mxu0 %v33
  %109 = vmatprep.subr.mxu0 0.0
  %110 = vmatpush2.msra.mxu0 0.0
  %111 = vmatprep.subr.mxu0 0.0
  %112 = vmatpush2.msra.mxu0 0.0
  %113 = vmatprep.subr.mxu0 0.0
  %114 = vmatpush2.msra.mxu0 0.0
  %115 = vmatprep.subr.mxu0 0.0
  %116 = vmatpush2.msra.mxu0 0.0
  %117 = vmatprep.subr.mxu0 0.0
  %118 = vmatpush2.msra.mxu0 0.0
  %119 = vmatprep.subr.mxu0 0.0
  %120 = vmatpush2.msra.mxu0 0.0
  %121 = vmatprep.subr.mxu0 0.0
  %122 = vmatpush2.msra.mxu0 0.0
  %123 = vmatprep.subr.mxu0 0.0
  %124 = vmatpush2.msra.mxu0 0.0
  %125 = vmatprep.subr.mxu0 0.0
  %126 = vmatpush2.msra.mxu0 0.0
  %127 = vmatprep.subr.mxu0 0.0
  %128 = vmatpush2.msra.mxu0 0.0
  %129 = vmatprep.subr.mxu0 0.0
  %130 = vmatpush2.msra.mxu0 0.0
  %131 = vmatprep.subr.mxu0 0.0
  %132 = vmatpush2.msra.mxu0 0.0
  %133 = vmatprep.subr.mxu0 0.0
  %134 = vmatpush2.msra.mxu0 0.0
  %135 = vmatprep.subr.mxu0 0.0
  %136 = vmatpush2.msra.mxu0 0.0
  %137 = vmatprep.subr.mxu0 0.0
  %138 = vmatpush2.msra.mxu0 0.0
  %139 = vmatprep.subr.mxu0 0.0
  %140 = vmatpush2.msra.mxu0 0.0
  %141 = vmatprep.mubr.f32.mxu0 0.0
  %142 = vmatmul.mubr.f32.gmra.mxu0 %v29
  %v143 = vpop.f32.mrf.mxu0
  %v144 = vadd.f32 %v70, %v143
  %v145 = vpop.f32.mrf.mxu0
  %v146 = vadd.f32 %v74, %v145
  %147 = vmatprep.mubr.f32.mxu0 0.0
  %148 = vmatmul.mubr.f32.gmra.mxu0 %v30
  %v149 = vpop.f32.mrf.mxu0
  %v150 = vadd.f32 %v70, %v149
  %v151 = vpop.f32.mrf.mxu0
  %v152 = vadd.f32 %v74, %v151
  %153 = vmatprep.mubr.f32.mxu0 0.0
  %154 = vmatmul.mubr.f32.gmra.mxu0 %v31
  %v155 = vpop.f32.mrf.mxu0
  %v156 = vadd.f32 %v70, %v155
  %v157 = vpop.f32.mrf.mxu0
  %v158 = vadd.f32 %v74, %v157
  %159 = vmatprep.mubr.f32.mxu0 0.0
  %160 = vmatmul.mubr.f32.gmra.mxu0 %v32
  %v161 = vpop.f32.mrf.mxu0
  %v162 = vadd.f32 %v70, %v161
  %v163 = vpop.f32.mrf.mxu0
  %v164 = vadd.f32 %v74, %v163
  %165 = vdwg.mxu0
  %170 = vrot.lane.b32.xlu0 %v144, 32
  %v171 = vpop.permute.xlu0 %170
  %172 = vrot.lane.b32.xlu0 %v150, 32
  %v173 = vpop.permute.xlu0 %172
  %174 = vrot.lane.b32.xlu0 %v156, 32
  %v175 = vpop.permute.xlu0 %174
  %176 = vrot.lane.b32.xlu0 %v162, 32
  %v177 = vpop.permute.xlu0 %176
  %vm178 = vcmask 261120
  %v179 = vsel %vm178, %v144, 0
  %v181 = vsel %vm178, %v150, 0
  %v183 = vsel %vm178, %v156, 0
  %v185 = vsel %vm178, %v162, 0
  %v187 = vsel %vm178, %v171, 0
  %v189 = vsel %vm178, %v173, 0
  %v191 = vsel %vm178, %v175, 0
  %v193 = vsel %vm178, %v177, 0
  %195 = vmatprep.subr.mxu0 0.0
  %196 = vmatpush1.xpose.msra.mxu0 0.0
  %197 = vmatprep.subr.mxu0 0.0
  %198 = vmatpush1.xpose.msra.mxu0 0.0
  %199 = vmatprep.subr.mxu0 0.0
  %200 = vmatpush1.xpose.msra.mxu0 0.0
  %201 = vmatprep.subr.mxu0 0.0
  %202 = vmatpush1.xpose.msra.mxu0 0.0
  %203 = vmatprep.subr.mxu0 0.0
  %204 = vmatpush1.xpose.msra.mxu0 0.0
  %205 = vmatprep.subr.mxu0 0.0
  %206 = vmatpush1.xpose.msra.mxu0 0.0
  %207 = vmatprep.subr.mxu0 0.0
  %208 = vmatpush1.xpose.msra.mxu0 0.0
  %209 = vmatprep.subr.mxu0 0.0
  %210 = vmatpush1.xpose.msra.mxu0 0.0
  %211 = vmatprep.subr.mxu0 0.0
  %212 = vmatpush1.xpose.msra.mxu0 0.0
  %213 = vmatprep.subr.mxu0 0.0
  %214 = vmatpush1.xpose.msra.mxu0 0.0
  %215 = vmatprep.subr.mxu0 0.0
  %216 = vmatpush1.xpose.msra.mxu0 0.0
  %217 = vmatprep.subr.mxu0 0.0
  %218 = vmatpush1.xpose.msra.mxu0 0.0
  %219 = vmatprep.subr.mxu0 0.0
  %220 = vmatpush1.xpose.msra.mxu0 %v193
  %221 = vmatprep.subr.mxu0 0.0
  %222 = vmatpush1.xpose.msra.mxu0 %v191
  %223 = vmatprep.subr.mxu0 0.0
  %224 = vmatpush1.xpose.msra.mxu0 %v189
  %225 = vmatprep.subr.mxu0 0.0
  %226 = vmatpush1.xpose.msra.mxu0 %v187
  %227 = vmatprep.subr.mxu0 0.0
  %228 = vmatpush2.xpose.msra.mxu0 0.0
  %229 = vmatprep.subr.mxu0 0.0
  %230 = vmatpush2.xpose.msra.mxu0 0.0
  %231 = vmatprep.subr.mxu0 0.0
  %232 = vmatpush2.xpose.msra.mxu0 0.0
  %233 = vmatprep.subr.mxu0 0.0
  %234 = vmatpush2.xpose.msra.mxu0 0.0
  %235 = vmatprep.subr.mxu0 0.0
  %236 = vmatpush2.xpose.msra.mxu0 0.0
  %237 = vmatprep.subr.mxu0 0.0
  %238 = vmatpush2.xpose.msra.mxu0 0.0
  %239 = vmatprep.subr.mxu0 0.0
  %240 = vmatpush2.xpose.msra.mxu0 0.0
  %241 = vmatprep.subr.mxu0 0.0
  %242 = vmatpush2.xpose.msra.mxu0 0.0
  %243 = vmatprep.subr.mxu0 0.0
  %244 = vmatpush2.xpose.msra.mxu0 0.0
  %245 = vmatprep.subr.mxu0 0.0
  %246 = vmatpush2.xpose.msra.mxu0 0.0
  %247 = vmatprep.subr.mxu0 0.0
  %248 = vmatpush2.xpose.msra.mxu0 0.0
  %249 = vmatprep.subr.mxu0 0.0
  %250 = vmatpush2.xpose.msra.mxu0 0.0
  %251 = vmatprep.subr.mxu0 0.0
  %252 = vmatpush2.xpose.msra.mxu0 0.0
  %253 = vmatprep.subr.mxu0 0.0
  %254 = vmatpush2.xpose.msra.mxu0 0.0
  %255 = vmatprep.subr.mxu0 0.0
  %256 = vmatpush2.xpose.msra.mxu0 0.0
  %257 = vmatprep.subr.mxu0 0.0
  %258 = vmatpush2.xpose.msra.mxu0 0.0
  %259 = vmatprep.mubr.f32.mxu0 0.0
  %260 = vmatmul.mubr.f32.gmra.mxu0 %v179
  %v261 = vpop.f32.mrf.mxu0
  %v262 = vadd.f32 0.0, %v261
  %v263 = vpop.f32.mrf.mxu0
  %264 = vmatprep.mubr.f32.mxu0 0.0
  %265 = vmatmul.mubr.f32.gmra.mxu0 %v181
  %v266 = vpop.f32.mrf.mxu0
  %v267 = vadd.f32 0.0, %v266
  %v268 = vpop.f32.mrf.mxu0
  %269 = vmatprep.mubr.f32.mxu0 0.0
  %270 = vmatmul.mubr.f32.gmra.mxu0 %v183
  %v271 = vpop.f32.mrf.mxu0
  %v272 = vadd.f32 0.0, %v271
  %v273 = vpop.f32.mrf.mxu0
  %274 = vmatprep.mubr.f32.mxu0 0.0
  %275 = vmatmul.mubr.f32.gmra.mxu0 %v185
  %v276 = vpop.f32.mrf.mxu0
  %v277 = vadd.f32 0.0, %v276
  %v278 = vpop.f32.mrf.mxu0
  %279 = vdwg.mxu0
  %280 = vrot.lane.b32.xlu0 %v144, 96
  %v281 = vpop.permute.xlu0 %280
  %282 = vrot.lane.b32.xlu0 %v150, 96
  %v283 = vpop.permute.xlu0 %282
  %284 = vrot.lane.b32.xlu0 %v156, 96
  %v285 = vpop.permute.xlu0 %284
  %286 = vrot.lane.b32.xlu0 %v162, 96
  %v287 = vpop.permute.xlu0 %286
  %v288 = vsel %vm178, %v281, 0
  %v290 = vsel %vm178, %v283, 0
  %v292 = vsel %vm178, %v285, 0
  %v294 = vsel %vm178, %v287, 0
  %v297 = vsel %vm178, %v146, 0
  %v300 = vsel %vm178, %v152, 0
  %v303 = vsel %vm178, %v158, 0
  %v306 = vsel %vm178, %v164, 0
  %308 = vmatprep.subr.mxu0 0.0
  %309 = vmatpush1.xpose.msra.mxu0 0.0
  %310 = vmatprep.subr.mxu0 0.0
  %311 = vmatpush1.xpose.msra.mxu0 0.0
  %312 = vmatprep.subr.mxu0 0.0
  %313 = vmatpush1.xpose.msra.mxu0 0.0
  %314 = vmatprep.subr.mxu0 0.0
  %315 = vmatpush1.xpose.msra.mxu0 0.0
  %316 = vmatprep.subr.mxu0 0.0
  %317 = vmatpush1.xpose.msra.mxu0 0.0
  %318 = vmatprep.subr.mxu0 0.0
  %319 = vmatpush1.xpose.msra.mxu0 0.0
  %320 = vmatprep.subr.mxu0 0.0
  %321 = vmatpush1.xpose.msra.mxu0 0.0
  %322 = vmatprep.subr.mxu0 0.0
  %323 = vmatpush1.xpose.msra.mxu0 0.0
  %324 = vmatprep.subr.mxu0 0.0
  %325 = vmatpush1.xpose.msra.mxu0 0.0
  %326 = vmatprep.subr.mxu0 0.0
  %327 = vmatpush1.xpose.msra.mxu0 0.0
  %328 = vmatprep.subr.mxu0 0.0
  %329 = vmatpush1.xpose.msra.mxu0 0.0
  %330 = vmatprep.subr.mxu0 0.0
  %331 = vmatpush1.xpose.msra.mxu0 0.0
  %332 = vmatprep.subr.mxu0 0.0
  %333 = vmatpush1.xpose.msra.mxu0 %v306
  %334 = vmatprep.subr.mxu0 0.0
  %335 = vmatpush1.xpose.msra.mxu0 %v303
  %336 = vmatprep.subr.mxu0 0.0
  %337 = vmatpush1.xpose.msra.mxu0 %v300
  %338 = vmatprep.subr.mxu0 0.0
  %339 = vmatpush1.xpose.msra.mxu0 %v297
  %340 = vmatprep.subr.mxu0 0.0
  %341 = vmatpush2.xpose.msra.mxu0 0.0
  %342 = vmatprep.subr.mxu0 0.0
  %343 = vmatpush2.xpose.msra.mxu0 0.0
  %344 = vmatprep.subr.mxu0 0.0
  %345 = vmatpush2.xpose.msra.mxu0 0.0
  %346 = vmatprep.subr.mxu0 0.0
  %347 = vmatpush2.xpose.msra.mxu0 0.0
  %348 = vmatprep.subr.mxu0 0.0
  %349 = vmatpush2.xpose.msra.mxu0 0.0
  %350 = vmatprep.subr.mxu0 0.0
  %351 = vmatpush2.xpose.msra.mxu0 0.0
  %352 = vmatprep.subr.mxu0 0.0
  %353 = vmatpush2.xpose.msra.mxu0 0.0
  %354 = vmatprep.subr.mxu0 0.0
  %355 = vmatpush2.xpose.msra.mxu0 0.0
  %356 = vmatprep.subr.mxu0 0.0
  %357 = vmatpush2.xpose.msra.mxu0 0.0
  %358 = vmatprep.subr.mxu0 0.0
  %359 = vmatpush2.xpose.msra.mxu0 0.0
  %360 = vmatprep.subr.mxu0 0.0
  %361 = vmatpush2.xpose.msra.mxu0 0.0
  %362 = vmatprep.subr.mxu0 0.0
  %363 = vmatpush2.xpose.msra.mxu0 0.0
  %364 = vmatprep.subr.mxu0 0.0
  %365 = vmatpush2.xpose.msra.mxu0 0.0
  %366 = vmatprep.subr.mxu0 0.0
  %367 = vmatpush2.xpose.msra.mxu0 0.0
  %368 = vmatprep.subr.mxu0 0.0
  %369 = vmatpush2.xpose.msra.mxu0 0.0
  %370 = vmatprep.subr.mxu0 0.0
  %371 = vmatpush2.xpose.msra.mxu0 0.0
  %372 = vmatprep.mubr.f32.mxu0 0.0
  %373 = vmatmul.mubr.f32.gmra.mxu0 %v288
  %v374 = vpop.f32.mrf.mxu0
  %v375 = vadd.f32 0.0, %v374
  %v376 = vpop.f32.mrf.mxu0
  %377 = vmatprep.mubr.f32.mxu0 0.0
  %378 = vmatmul.mubr.f32.gmra.mxu0 %v290
  %v379 = vpop.f32.mrf.mxu0
  %v380 = vadd.f32 0.0, %v379
  %v381 = vpop.f32.mrf.mxu0
  %382 = vmatprep.mubr.f32.mxu0 0.0
  %383 = vmatmul.mubr.f32.gmra.mxu0 %v292
  %v384 = vpop.f32.mrf.mxu0
  %v385 = vadd.f32 0.0, %v384
  %v386 = vpop.f32.mrf.mxu0
  %387 = vmatprep.mubr.f32.mxu0 0.0
  %388 = vmatmul.mubr.f32.gmra.mxu0 %v294
  %v389 = vpop.f32.mrf.mxu0
  %v390 = vadd.f32 0.0, %v389
  %v391 = vpop.f32.mrf.mxu0
  %392 = vdwg.mxu0
  %393 = vrot.lane.b32.xlu0 %v144, 64
  %v394 = vpop.permute.xlu0 %393
  %395 = vrot.lane.b32.xlu0 %v150, 64
  %v396 = vpop.permute.xlu0 %395
  %397 = vrot.lane.b32.xlu0 %v156, 64
  %v398 = vpop.permute.xlu0 %397
  %399 = vrot.lane.b32.xlu0 %v162, 64
  %v400 = vpop.permute.xlu0 %399
  %401 = vrot.lane.b32.xlu0 %v146, 96
  %v402 = vpop.permute.xlu0 %401
  %403 = vrot.lane.b32.xlu0 %v152, 96
  %v404 = vpop.permute.xlu0 %403
  %405 = vrot.lane.b32.xlu0 %v158, 96
  %v406 = vpop.permute.xlu0 %405
  %407 = vrot.lane.b32.xlu0 %v164, 96
  %v408 = vpop.permute.xlu0 %407
  %v409 = vsel %vm178, %v394, 0
  %v411 = vsel %vm178, %v396, 0
  %v413 = vsel %vm178, %v398, 0
  %v415 = vsel %vm178, %v400, 0
  %v417 = vsel %vm178, %v402, 0
  %v419 = vsel %vm178, %v404, 0
  %v421 = vsel %vm178, %v406, 0
  %v423 = vsel %vm178, %v408, 0
  %425 = vmatprep.subr.mxu0 0.0
  %426 = vmatpush1.xpose.msra.mxu0 0.0
  %427 = vmatprep.subr.mxu0 0.0
  %428 = vmatpush1.xpose.msra.mxu0 0.0
  %429 = vmatprep.subr.mxu0 0.0
  %430 = vmatpush1.xpose.msra.mxu0 0.0
  %431 = vmatprep.subr.mxu0 0.0
  %432 = vmatpush1.xpose.msra.mxu0 0.0
  %433 = vmatprep.subr.mxu0 0.0
  %434 = vmatpush1.xpose.msra.mxu0 0.0
  %435 = vmatprep.subr.mxu0 0.0
  %436 = vmatpush1.xpose.msra.mxu0 0.0
  %437 = vmatprep.subr.mxu0 0.0
  %438 = vmatpush1.xpose.msra.mxu0 0.0
  %439 = vmatprep.subr.mxu0 0.0
  %440 = vmatpush1.xpose.msra.mxu0 0.0
  %441 = vmatprep.subr.mxu0 0.0
  %442 = vmatpush1.xpose.msra.mxu0 0.0
  %443 = vmatprep.subr.mxu0 0.0
  %444 = vmatpush1.xpose.msra.mxu0 0.0
  %445 = vmatprep.subr.mxu0 0.0
  %446 = vmatpush1.xpose.msra.mxu0 0.0
  %447 = vmatprep.subr.mxu0 0.0
  %448 = vmatpush1.xpose.msra.mxu0 0.0
  %449 = vmatprep.subr.mxu0 0.0
  %450 = vmatpush1.xpose.msra.mxu0 %v423
  %451 = vmatprep.subr.mxu0 0.0
  %452 = vmatpush1.xpose.msra.mxu0 %v421
  %453 = vmatprep.subr.mxu0 0.0
  %454 = vmatpush1.xpose.msra.mxu0 %v419
  %455 = vmatprep.subr.mxu0 0.0
  %456 = vmatpush1.xpose.msra.mxu0 %v417
  %457 = vmatprep.subr.mxu0 0.0
  %458 = vmatpush2.xpose.msra.mxu0 0.0
  %459 = vmatprep.subr.mxu0 0.0
  %460 = vmatpush2.xpose.msra.mxu0 0.0
  %461 = vmatprep.subr.mxu0 0.0
  %462 = vmatpush2.xpose.msra.mxu0 0.0
  %463 = vmatprep.subr.mxu0 0.0
  %464 = vmatpush2.xpose.msra.mxu0 0.0
  %465 = vmatprep.subr.mxu0 0.0
  %466 = vmatpush2.xpose.msra.mxu0 0.0
  %467 = vmatprep.subr.mxu0 0.0
  %468 = vmatpush2.xpose.msra.mxu0 0.0
  %469 = vmatprep.subr.mxu0 0.0
  %470 = vmatpush2.xpose.msra.mxu0 0.0
  %471 = vmatprep.subr.mxu0 0.0
  %472 = vmatpush2.xpose.msra.mxu0 0.0
  %473 = vmatprep.subr.mxu0 0.0
  %474 = vmatpush2.xpose.msra.mxu0 0.0
  %475 = vmatprep.subr.mxu0 0.0
  %476 = vmatpush2.xpose.msra.mxu0 0.0
  %477 = vmatprep.subr.mxu0 0.0
  %478 = vmatpush2.xpose.msra.mxu0 0.0
  %479 = vmatprep.subr.mxu0 0.0
  %480 = vmatpush2.xpose.msra.mxu0 0.0
  %481 = vmatprep.subr.mxu0 0.0
  %482 = vmatpush2.xpose.msra.mxu0 0.0
  %483 = vmatprep.subr.mxu0 0.0
  %484 = vmatpush2.xpose.msra.mxu0 0.0
  %485 = vmatprep.subr.mxu0 0.0
  %486 = vmatpush2.xpose.msra.mxu0 0.0
  %487 = vmatprep.subr.mxu0 0.0
  %488 = vmatpush2.xpose.msra.mxu0 0.0
  %489 = vmatprep.mubr.f32.mxu0 0.0
  %490 = vmatmul.mubr.f32.gmra.mxu0 %v409
  %v491 = vpop.f32.mrf.mxu0
  %v492 = vadd.f32 0.0, %v491
  %v493 = vpop.f32.mrf.mxu0
  %494 = vmatprep.mubr.f32.mxu0 0.0
  %495 = vmatmul.mubr.f32.gmra.mxu0 %v411
  %v496 = vpop.f32.mrf.mxu0
  %v497 = vadd.f32 0.0, %v496
  %v498 = vpop.f32.mrf.mxu0
  %499 = vmatprep.mubr.f32.mxu0 0.0
  %500 = vmatmul.mubr.f32.gmra.mxu0 %v413
  %v501 = vpop.f32.mrf.mxu0
  %v502 = vadd.f32 0.0, %v501
  %v503 = vpop.f32.mrf.mxu0
  %504 = vmatprep.mubr.f32.mxu0 0.0
  %505 = vmatmul.mubr.f32.gmra.mxu0 %v415
  %v506 = vpop.f32.mrf.mxu0
  %v507 = vadd.f32 0.0, %v506
  %v508 = vpop.f32.mrf.mxu0
  %509 = vdwg.mxu0
  %514 = vrot.lane.b32.xlu0 %v375, 32
  %v515 = vpop.permute.xlu0 %514
  %516 = vrot.lane.b32.xlu0 %v380, 32
  %v517 = vpop.permute.xlu0 %516
  %518 = vrot.lane.b32.xlu0 %v385, 32
  %v519 = vpop.permute.xlu0 %518
  %520 = vrot.lane.b32.xlu0 %v390, 32
  %v521 = vpop.permute.xlu0 %520
  %530 = vrot.lane.b32.xlu0 %v492, 64
  %v531 = vpop.permute.xlu0 %530
  %532 = vrot.lane.b32.xlu0 %v497, 64
  %v533 = vpop.permute.xlu0 %532
  %534 = vrot.lane.b32.xlu0 %v502, 64
  %v535 = vpop.permute.xlu0 %534
  %536 = vrot.lane.b32.xlu0 %v507, 64
  %v537 = vpop.permute.xlu0 %536
  %v542 = vsel %vm178, %v262, %v515
  %v543 = vsel %vm178, %v267, %v517
  %v544 = vsel %vm178, %v272, %v519
  %v545 = vsel %vm178, %v277, %v521
  %vm546 = vcmask 523264
  %v547 = vsel %vm546, %v542, %v531
  %v548 = vsel %vm546, %v543, %v533
  %v549 = vsel %vm546, %v544, %v535
  %v550 = vsel %vm546, %v545, %v537
  %v551 = vmul.f32 %v547, 0.03125
  %v552 = vmul.f32 %v548, 0.03125
  %v553 = vmul.f32 %v549, 0.03125
  %v554 = vmul.f32 %v550, 0.03125
  %v555 = vld [vmem:[%s3] sm:$0xff]
  %v556 = vld [vmem:[%s3 + $0x8] sm:$0xff]
  %v557 = vld [vmem:[%s3 + $0x10] sm:$0xff]
  %v558 = vld [vmem:[%s3 + $0x18] sm:$0xff]
  %v559 = vadd.f32 %v551, %v555
  %v560 = vadd.f32 %v552, %v556
  %v561 = vadd.f32 %v553, %v557
  %v562 = vadd.f32 %v554, %v558
  %vm563 = vcmask 785408
  %v564 = vsel %vm563, %v559, -inf
  %v565 = vsel %vm563, %v560, -inf
  %v566 = vsel %vm563, %v561, -inf
  %v567 = vsel %vm563, %v562, -inf
  %v568 = vmax.f32 %v564, %v565
  %v569 = vmax.f32 %v566, %v567
  %v570 = vmax.f32 %v568, %v569
  %v571 = vrot.slane %v570, 4
  %v572 = vmax.f32 %v570, %v571
  %v573 = vrot.slane %v572, 2
  %v574 = vmax.f32 %v572, %v573
  %v575 = vrot.slane %v574, 1
  %v576 = vmax.f32 %v574, %v575
  %v577 = vsub.f32 %v559, %v576
  %v578 = vsub.f32 %v560, %v576
  %v579 = vsub.f32 %v561, %v576
  %v580 = vsub.f32 %v562, %v576
  %v581 = vmul.f32 %v577, 1.442695
  %v582 = vpow.pop %v581
  %v583 = vmul.f32 %v578, 1.442695
  %v584 = vpow.pop %v583
  %v585 = vmul.f32 %v579, 1.442695
  %v586 = vpow.pop %v585
  %v587 = vmul.f32 %v580, 1.442695
  %v588 = vpow.pop %v587
  %v589 = vsel %vm563, %v582, 0.0
  %v590 = vsel %vm563, %v584, 0.0
  %v591 = vadd.f32 %v589, %v590
  %v592 = vsel %vm563, %v586, 0.0
  %v593 = vadd.f32 %v591, %v592
  %v594 = vsel %vm563, %v588, 0.0
  %v595 = vadd.f32 %v593, %v594
  %v596 = vrot.slane %v595, 4
  %v597 = vadd.f32 %v595, %v596
  %v598 = vrot.slane %v597, 2
  %v599 = vadd.f32 %v597, %v598
  %v600 = vrot.slane %v599, 1
  %v601 = vadd.f32 %v599, %v600
  %v602 = vrcp.pop %v601
  %v603 = vmul.f32 %v582, %v602
  %v604 = vmul.f32 %v584, %v602
  %v605 = vmul.f32 %v586, %v602
  %v606 = vmul.f32 %v588, %v602
  %v607 = vld [vmem:[%s4] sm:$0xff]
  %v608 = vld [vmem:[%s4 + $0x8] sm:$0xff]
  %v609 = vld [vmem:[%s4 + $0x10] sm:$0xff]
  %v610 = vld [vmem:[%s4 + $0x18] sm:$0xff]
  %v611 = vadd.f32 %v603, %v607
  %v612 = vadd.f32 %v604, %v608
  %v613 = vadd.f32 %v605, %v609
  %v614 = vadd.f32 %v606, %v610
  %615 = vxpose.xlu0.b32.start [1/16] %v611, 128
  %616 = vxpose.xlu0.b32.cont [2/16] %v612, 128
  %617 = vxpose.xlu0.b32.cont [3/16] %v613, 128
  %618 = vxpose.xlu0.b32.cont [4/16] %v614, 128
  %619 = vxpose.xlu0.b32.cont [5/16] 0.0, 128
  %620 = vxpose.xlu0.b32.cont [6/16] 0.0, 128
  %621 = vxpose.xlu0.b32.cont [7/16] 0.0, 128
  %622 = vxpose.xlu0.b32.cont [8/16] 0.0, 128
  %623 = vxpose.xlu0.b32.cont [9/16] 0.0, 128
  %624 = vxpose.xlu0.b32.cont [10/16] 0.0, 128
  %625 = vxpose.xlu0.b32.cont [11/16] 0.0, 128
  %626 = vxpose.xlu0.b32.cont [12/16] 0.0, 128
  %627 = vxpose.xlu0.b32.cont [13/16] 0.0, 128
  %628 = vxpose.xlu0.b32.cont [14/16] 0.0, 128
  %629 = vxpose.xlu0.b32.cont [15/16] 0.0, 128
  %630 = vxpose.xlu0.b32.end [16/16] 0.0, 128
  %v631 = vpop.trf.xlu0
  %v632 = vpop.trf.xlu0
  %v633 = vpop.trf.xlu0
  %v634 = vpop.trf.xlu0
  %v635 = vpop.trf.xlu0
  %v636 = vpop.trf.xlu0
  %v637 = vpop.trf.xlu0
  %v638 = vpop.trf.xlu0
  %v639 = vpop.trf.xlu0
  %v640 = vpop.trf.xlu0
  %v641 = vpop.trf.xlu0
  %v642 = vpop.trf.xlu0
  %v643 = vpop.trf.xlu0
  %v644 = vpop.trf.xlu0
  %v645 = vpop.trf.xlu0
  %v646 = vpop.trf.xlu0
  %v648 = vsel %vm178, %v631, 0
  %v651 = vsel %vm178, %v632, 0
  %v654 = vsel %vm178, %v633, 0
  %v657 = vsel %vm178, %v634, 0
  %659 = vmatprep.subr.mxu0 0.0
  %660 = vmatpush1.msra.mxu0 0.0
  %661 = vmatprep.subr.mxu0 0.0
  %662 = vmatpush1.msra.mxu0 0.0
  %663 = vmatprep.subr.mxu0 0.0
  %664 = vmatpush1.msra.mxu0 0.0
  %665 = vmatprep.subr.mxu0 0.0
  %666 = vmatpush1.msra.mxu0 0.0
  %667 = vmatprep.subr.mxu0 0.0
  %668 = vmatpush1.msra.mxu0 0.0
  %669 = vmatprep.subr.mxu0 0.0
  %670 = vmatpush1.msra.mxu0 0.0
  %671 = vmatprep.subr.mxu0 0.0
  %672 = vmatpush1.msra.mxu0 0.0
  %673 = vmatprep.subr.mxu0 0.0
  %674 = vmatpush1.msra.mxu0 0.0
  %675 = vmatprep.subr.mxu0 0.0
  %676 = vmatpush1.msra.mxu0 0.0
  %677 = vmatprep.subr.mxu0 0.0
  %678 = vmatpush1.msra.mxu0 0.0
  %679 = vmatprep.subr.mxu0 0.0
  %680 = vmatpush1.msra.mxu0 0.0
  %681 = vmatprep.subr.mxu0 0.0
  %682 = vmatpush1.msra.mxu0 0.0
  %683 = vmatprep.subr.mxu0 0.0
  %684 = vmatpush1.msra.mxu0 %v32
  %685 = vmatprep.subr.mxu0 0.0
  %686 = vmatpush1.msra.mxu0 %v31
  %687 = vmatprep.subr.mxu0 0.0
  %688 = vmatpush1.msra.mxu0 %v30
  %689 = vmatprep.subr.mxu0 0.0
  %690 = vmatpush1.msra.mxu0 %v29
  %691 = vmatprep.subr.mxu0 0.0
  %692 = vmatpush2.msra.mxu0 0.0
  %693 = vmatprep.subr.mxu0 0.0
  %694 = vmatpush2.msra.mxu0 0.0
  %695 = vmatprep.subr.mxu0 0.0
  %696 = vmatpush2.msra.mxu0 0.0
  %697 = vmatprep.subr.mxu0 0.0
  %698 = vmatpush2.msra.mxu0 0.0
  %699 = vmatprep.subr.mxu0 0.0
  %700 = vmatpush2.msra.mxu0 0.0
  %701 = vmatprep.subr.mxu0 0.0
  %702 = vmatpush2.msra.mxu0 0.0
  %703 = vmatprep.subr.mxu0 0.0
  %704 = vmatpush2.msra.mxu0 0.0
  %705 = vmatprep.subr.mxu0 0.0
  %706 = vmatpush2.msra.mxu0 0.0
  %707 = vmatprep.subr.mxu0 0.0
  %708 = vmatpush2.msra.mxu0 0.0
  %709 = vmatprep.subr.mxu0 0.0
  %710 = vmatpush2.msra.mxu0 0.0
  %711 = vmatprep.subr.mxu0 0.0
  %712 = vmatpush2.msra.mxu0 0.0
  %713 = vmatprep.subr.mxu0 0.0
  %714 = vmatpush2.msra.mxu0 0.0
  %715 = vmatprep.subr.mxu0 0.0
  %716 = vmatpush2.msra.mxu0 0.0
  %717 = vmatprep.subr.mxu0 0.0
  %718 = vmatpush2.msra.mxu0 0.0
  %719 = vmatprep.subr.mxu0 0.0
  %720 = vmatpush2.msra.mxu0 0.0
  %721 = vmatprep.subr.mxu0 0.0
  %722 = vmatpush2.msra.mxu0 0.0
  %723 = vmatprep.mubr.f32.mxu0 0.0
  %724 = vmatmul.mubr.f32.gmra.mxu0 %v648
  %v725 = vpop.f32.mrf.mxu0
  %v726 = vadd.f32 0.0, %v725
  %v727 = vpop.f32.mrf.mxu0
  %728 = vmatprep.mubr.f32.mxu0 0.0
  %729 = vmatmul.mubr.f32.gmra.mxu0 %v651
  %v730 = vpop.f32.mrf.mxu0
  %v731 = vadd.f32 0.0, %v730
  %v732 = vpop.f32.mrf.mxu0
  %733 = vmatprep.mubr.f32.mxu0 0.0
  %734 = vmatmul.mubr.f32.gmra.mxu0 %v654
  %v735 = vpop.f32.mrf.mxu0
  %v736 = vadd.f32 0.0, %v735
  %v737 = vpop.f32.mrf.mxu0
  %738 = vmatprep.mubr.f32.mxu0 0.0
  %739 = vmatmul.mubr.f32.gmra.mxu0 %v657
  %v740 = vpop.f32.mrf.mxu0
  %v741 = vadd.f32 0.0, %v740
  %v742 = vpop.f32.mrf.mxu0
  %743 = vdwg.mxu0
  %748 = vrot.lane.b32.xlu0 %v611, 96
  %v749 = vpop.permute.xlu0 %748
  %750 = vrot.lane.b32.xlu0 %v612, 96
  %v751 = vpop.permute.xlu0 %750
  %752 = vrot.lane.b32.xlu0 %v613, 96
  %v753 = vpop.permute.xlu0 %752
  %754 = vrot.lane.b32.xlu0 %v614, 96
  %v755 = vpop.permute.xlu0 %754
  %760 = vxpose.xlu0.b32.start [1/16] %v749, 128
  %761 = vxpose.xlu0.b32.cont [2/16] %v751, 128
  %762 = vxpose.xlu0.b32.cont [3/16] %v753, 128
  %763 = vxpose.xlu0.b32.cont [4/16] %v755, 128
  %764 = vxpose.xlu0.b32.cont [5/16] 0.0, 128
  %765 = vxpose.xlu0.b32.cont [6/16] 0.0, 128
  %766 = vxpose.xlu0.b32.cont [7/16] 0.0, 128
  %767 = vxpose.xlu0.b32.cont [8/16] 0.0, 128
  %768 = vxpose.xlu0.b32.cont [9/16] 0.0, 128
  %769 = vxpose.xlu0.b32.cont [10/16] 0.0, 128
  %770 = vxpose.xlu0.b32.cont [11/16] 0.0, 128
  %771 = vxpose.xlu0.b32.cont [12/16] 0.0, 128
  %772 = vxpose.xlu0.b32.cont [13/16] 0.0, 128
  %773 = vxpose.xlu0.b32.cont [14/16] 0.0, 128
  %774 = vxpose.xlu0.b32.cont [15/16] 0.0, 128
  %775 = vxpose.xlu0.b32.end [16/16] 0.0, 128
  %v776 = vpop.trf.xlu0
  %v777 = vpop.trf.xlu0
  %v778 = vpop.trf.xlu0
  %v779 = vpop.trf.xlu0
  %v780 = vpop.trf.xlu0
  %v781 = vpop.trf.xlu0
  %v782 = vpop.trf.xlu0
  %v783 = vpop.trf.xlu0
  %v784 = vpop.trf.xlu0
  %v785 = vpop.trf.xlu0
  %v786 = vpop.trf.xlu0
  %v787 = vpop.trf.xlu0
  %v788 = vpop.trf.xlu0
  %v789 = vpop.trf.xlu0
  %v790 = vpop.trf.xlu0
  %v791 = vpop.trf.xlu0
  %v793 = vsel %vm178, %v776, 0
  %v796 = vsel %vm178, %v777, 0
  %v799 = vsel %vm178, %v778, 0
  %v802 = vsel %vm178, %v779, 0
  %804 = vmatprep.subr.mxu0 0.0
  %805 = vmatpush1.msra.mxu0 0.0
  %806 = vmatprep.subr.mxu0 0.0
  %807 = vmatpush1.msra.mxu0 0.0
  %808 = vmatprep.subr.mxu0 0.0
  %809 = vmatpush1.msra.mxu0 0.0
  %810 = vmatprep.subr.mxu0 0.0
  %811 = vmatpush1.msra.mxu0 0.0
  %812 = vmatprep.subr.mxu0 0.0
  %813 = vmatpush1.msra.mxu0 0.0
  %814 = vmatprep.subr.mxu0 0.0
  %815 = vmatpush1.msra.mxu0 0.0
  %816 = vmatprep.subr.mxu0 0.0
  %817 = vmatpush1.msra.mxu0 0.0
  %818 = vmatprep.subr.mxu0 0.0
  %819 = vmatpush1.msra.mxu0 0.0
  %820 = vmatprep.subr.mxu0 0.0
  %821 = vmatpush1.msra.mxu0 0.0
  %822 = vmatprep.subr.mxu0 0.0
  %823 = vmatpush1.msra.mxu0 0.0
  %824 = vmatprep.subr.mxu0 0.0
  %825 = vmatpush1.msra.mxu0 0.0
  %826 = vmatprep.subr.mxu0 0.0
  %827 = vmatpush1.msra.mxu0 0.0
  %828 = vmatprep.subr.mxu0 0.0
  %829 = vmatpush1.msra.mxu0 %v32
  %830 = vmatprep.subr.mxu0 0.0
  %831 = vmatpush1.msra.mxu0 %v31
  %832 = vmatprep.subr.mxu0 0.0
  %833 = vmatpush1.msra.mxu0 %v30
  %834 = vmatprep.subr.mxu0 0.0
  %835 = vmatpush1.msra.mxu0 %v29
  %836 = vmatprep.subr.mxu0 0.0
  %837 = vmatpush2.msra.mxu0 0.0
  %838 = vmatprep.subr.mxu0 0.0
  %839 = vmatpush2.msra.mxu0 0.0
  %840 = vmatprep.subr.mxu0 0.0
  %841 = vmatpush2.msra.mxu0 0.0
  %842 = vmatprep.subr.mxu0 0.0
  %843 = vmatpush2.msra.mxu0 0.0
  %844 = vmatprep.subr.mxu0 0.0
  %845 = vmatpush2.msra.mxu0 0.0
  %846 = vmatprep.subr.mxu0 0.0
  %847 = vmatpush2.msra.mxu0 0.0
  %848 = vmatprep.subr.mxu0 0.0
  %849 = vmatpush2.msra.mxu0 0.0
  %850 = vmatprep.subr.mxu0 0.0
  %851 = vmatpush2.msra.mxu0 0.0
  %852 = vmatprep.subr.mxu0 0.0
  %853 = vmatpush2.msra.mxu0 0.0
  %854 = vmatprep.subr.mxu0 0.0
  %855 = vmatpush2.msra.mxu0 0.0
  %856 = vmatprep.subr.mxu0 0.0
  %857 = vmatpush2.msra.mxu0 0.0
  %858 = vmatprep.subr.mxu0 0.0
  %859 = vmatpush2.msra.mxu0 0.0
  %860 = vmatprep.subr.mxu0 0.0
  %861 = vmatpush2.msra.mxu0 0.0
  %862 = vmatprep.subr.mxu0 0.0
  %863 = vmatpush2.msra.mxu0 0.0
  %864 = vmatprep.subr.mxu0 0.0
  %865 = vmatpush2.msra.mxu0 0.0
  %866 = vmatprep.subr.mxu0 0.0
  %867 = vmatpush2.msra.mxu0 0.0
  %868 = vmatprep.mubr.f32.mxu0 0.0
  %869 = vmatmul.mubr.f32.gmra.mxu0 %v793
  %v870 = vpop.f32.mrf.mxu0
  %v871 = vadd.f32 0.0, %v870
  %v872 = vpop.f32.mrf.mxu0
  %873 = vmatprep.mubr.f32.mxu0 0.0
  %874 = vmatmul.mubr.f32.gmra.mxu0 %v796
  %v875 = vpop.f32.mrf.mxu0
  %v876 = vadd.f32 0.0, %v875
  %v877 = vpop.f32.mrf.mxu0
  %878 = vmatprep.mubr.f32.mxu0 0.0
  %879 = vmatmul.mubr.f32.gmra.mxu0 %v799
  %v880 = vpop.f32.mrf.mxu0
  %v881 = vadd.f32 0.0, %v880
  %v882 = vpop.f32.mrf.mxu0
  %883 = vmatprep.mubr.f32.mxu0 0.0
  %884 = vmatmul.mubr.f32.gmra.mxu0 %v802
  %v885 = vpop.f32.mrf.mxu0
  %v886 = vadd.f32 0.0, %v885
  %v887 = vpop.f32.mrf.mxu0
  %888 = vdwg.mxu0
  %889 = vrot.lane.b32.xlu0 %v611, 64
  %v890 = vpop.permute.xlu0 %889
  %891 = vrot.lane.b32.xlu0 %v612, 64
  %v892 = vpop.permute.xlu0 %891
  %893 = vrot.lane.b32.xlu0 %v613, 64
  %v894 = vpop.permute.xlu0 %893
  %895 = vrot.lane.b32.xlu0 %v614, 64
  %v896 = vpop.permute.xlu0 %895
  %901 = vxpose.xlu0.b32.start [1/16] %v890, 128
  %902 = vxpose.xlu0.b32.cont [2/16] %v892, 128
  %903 = vxpose.xlu0.b32.cont [3/16] %v894, 128
  %904 = vxpose.xlu0.b32.cont [4/16] %v896, 128
  %905 = vxpose.xlu0.b32.cont [5/16] 0.0, 128
  %906 = vxpose.xlu0.b32.cont [6/16] 0.0, 128
  %907 = vxpose.xlu0.b32.cont [7/16] 0.0, 128
  %908 = vxpose.xlu0.b32.cont [8/16] 0.0, 128
  %909 = vxpose.xlu0.b32.cont [9/16] 0.0, 128
  %910 = vxpose.xlu0.b32.cont [10/16] 0.0, 128
  %911 = vxpose.xlu0.b32.cont [11/16] 0.0, 128
  %912 = vxpose.xlu0.b32.cont [12/16] 0.0, 128
  %913 = vxpose.xlu0.b32.cont [13/16] 0.0, 128
  %914 = vxpose.xlu0.b32.cont [14/16] 0.0, 128
  %915 = vxpose.xlu0.b32.cont [15/16] 0.0, 128
  %916 = vxpose.xlu0.b32.end [16/16] 0.0, 128
  %v917 = vpop.trf.xlu0
  %v918 = vpop.trf.xlu0
  %v919 = vpop.trf.xlu0
  %v920 = vpop.trf.xlu0
  %v921 = vpop.trf.xlu0
  %v922 = vpop.trf.xlu0
  %v923 = vpop.trf.xlu0
  %v924 = vpop.trf.xlu0
  %v925 = vpop.trf.xlu0
  %v926 = vpop.trf.xlu0
  %v927 = vpop.trf.xlu0
  %v928 = vpop.trf.xlu0
  %v929 = vpop.trf.xlu0
  %v930 = vpop.trf.xlu0
  %v931 = vpop.trf.xlu0
  %v932 = vpop.trf.xlu0
  %v934 = vsel %vm178, %v917, 0
  %v937 = vsel %vm178, %v918, 0
  %v940 = vsel %vm178, %v919, 0
  %v943 = vsel %vm178, %v920, 0
  %945 = vmatprep.subr.mxu0 0.0
  %946 = vmatpush1.msra.mxu0 0.0
  %947 = vmatprep.subr.mxu0 0.0
  %948 = vmatpush1.msra.mxu0 0.0
  %949 = vmatprep.subr.mxu0 0.0
  %950 = vmatpush1.msra.mxu0 0.0
  %951 = vmatprep.subr.mxu0 0.0
  %952 = vmatpush1.msra.mxu0 0.0
  %953 = vmatprep.subr.mxu0 0.0
  %954 = vmatpush1.msra.mxu0 0.0
  %955 = vmatprep.subr.mxu0 0.0
  %956 = vmatpush1.msra.mxu0 0.0
  %957 = vmatprep.subr.mxu0 0.0
  %958 = vmatpush1.msra.mxu0 0.0
  %959 = vmatprep.subr.mxu0 0.0
  %960 = vmatpush1.msra.mxu0 0.0
  %961 = vmatprep.subr.mxu0 0.0
  %962 = vmatpush1.msra.mxu0 0.0
  %963 = vmatprep.subr.mxu0 0.0
  %964 = vmatpush1.msra.mxu0 0.0
  %965 = vmatprep.subr.mxu0 0.0
  %966 = vmatpush1.msra.mxu0 0.0
  %967 = vmatprep.subr.mxu0 0.0
  %968 = vmatpush1.msra.mxu0 0.0
  %969 = vmatprep.subr.mxu0 0.0
  %970 = vmatpush1.msra.mxu0 %v32
  %971 = vmatprep.subr.mxu0 0.0
  %972 = vmatpush1.msra.mxu0 %v31
  %973 = vmatprep.subr.mxu0 0.0
  %974 = vmatpush1.msra.mxu0 %v30
  %975 = vmatprep.subr.mxu0 0.0
  %976 = vmatpush1.msra.mxu0 %v29
  %977 = vmatprep.subr.mxu0 0.0
  %978 = vmatpush2.msra.mxu0 0.0
  %979 = vmatprep.subr.mxu0 0.0
  %980 = vmatpush2.msra.mxu0 0.0
  %981 = vmatprep.subr.mxu0 0.0
  %982 = vmatpush2.msra.mxu0 0.0
  %983 = vmatprep.subr.mxu0 0.0
  %984 = vmatpush2.msra.mxu0 0.0
  %985 = vmatprep.subr.mxu0 0.0
  %986 = vmatpush2.msra.mxu0 0.0
  %987 = vmatprep.subr.mxu0 0.0
  %988 = vmatpush2.msra.mxu0 0.0
  %989 = vmatprep.subr.mxu0 0.0
  %990 = vmatpush2.msra.mxu0 0.0
  %991 = vmatprep.subr.mxu0 0.0
  %992 = vmatpush2.msra.mxu0 0.0
  %993 = vmatprep.subr.mxu0 0.0
  %994 = vmatpush2.msra.mxu0 0.0
  %995 = vmatprep.subr.mxu0 0.0
  %996 = vmatpush2.msra.mxu0 0.0
  %997 = vmatprep.subr.mxu0 0.0
  %998 = vmatpush2.msra.mxu0 0.0
  %999 = vmatprep.subr.mxu0 0.0
  %1000 = vmatpush2.msra.mxu0 0.0
  %1001 = vmatprep.subr.mxu0 0.0
  %1002 = vmatpush2.msra.mxu0 0.0
  %1003 = vmatprep.subr.mxu0 0.0
  %1004 = vmatpush2.msra.mxu0 0.0
  %1005 = vmatprep.subr.mxu0 0.0
  %1006 = vmatpush2.msra.mxu0 0.0
  %1007 = vmatprep.subr.mxu0 0.0
  %1008 = vmatpush2.msra.mxu0 0.0
  %1009 = vmatprep.mubr.f32.mxu0 0.0
  %1010 = vmatmul.mubr.f32.gmra.mxu0 %v934
  %v1011 = vpop.f32.mrf.mxu0
  %v1012 = vadd.f32 0.0, %v1011
  %v1013 = vpop.f32.mrf.mxu0
  %1014 = vmatprep.mubr.f32.mxu0 0.0
  %1015 = vmatmul.mubr.f32.gmra.mxu0 %v937
  %v1016 = vpop.f32.mrf.mxu0
  %v1017 = vadd.f32 0.0, %v1016
  %v1018 = vpop.f32.mrf.mxu0
  %1019 = vmatprep.mubr.f32.mxu0 0.0
  %1020 = vmatmul.mubr.f32.gmra.mxu0 %v940
  %v1021 = vpop.f32.mrf.mxu0
  %v1022 = vadd.f32 0.0, %v1021
  %v1023 = vpop.f32.mrf.mxu0
  %1024 = vmatprep.mubr.f32.mxu0 0.0
  %1025 = vmatmul.mubr.f32.gmra.mxu0 %v943
  %v1026 = vpop.f32.mrf.mxu0
  %v1027 = vadd.f32 0.0, %v1026
  %v1028 = vpop.f32.mrf.mxu0
  %1029 = vdwg.mxu0
  %v1030 = vld [vmem:[%s5] sm:$0xff]
  %v1031 = vld [vmem:[%s5 + $0x8] sm:$0xff]
  %v1032 = vld [vmem:[%s5 + $0x10] sm:$0xff]
  %v1033 = vld [vmem:[%s5 + $0x18] sm:$0xff]
  %v1034 = vld [vmem:[%s5 + $0x20] sm:$0xff]
  %v1035 = vld [vmem:[%s5 + $0x28] sm:$0xff]
  %v1036 = vld [vmem:[%s5 + $0x30] sm:$0xff]
  %v1037 = vld [vmem:[%s5 + $0x38] sm:$0xff]
  %v1038 = vld [vmem:[%s5 + $0x40] sm:$0xff]
  %v1039 = vld [vmem:[%s5 + $0x48] sm:$0xff]
  %v1040 = vld [vmem:[%s5 + $0x50] sm:$0xff]
  %v1041 = vld [vmem:[%s5 + $0x58] sm:$0xff]
  %v1042 = vld [vmem:[%s5 + $0x60] sm:$0xff]
  %v1043 = vld [vmem:[%s5 + $0x68] sm:$0xff]
  %v1044 = vld [vmem:[%s5 + $0x70] sm:$0xff]
  %v1045 = vld [vmem:[%s5 + $0x78] sm:$0xff]
  %v1046 = vld [vmem:[%s5 + $0x80] sm:$0xff]
  %v1047 = vld [vmem:[%s5 + $0x88] sm:$0xff]
  %v1048 = vld [vmem:[%s5 + $0x90] sm:$0xff]
  %v1049 = vld [vmem:[%s5 + $0x98] sm:$0xff]
  %v1050 = vld [vmem:[%s5 + $0xa0] sm:$0xff]
  %v1051 = vld [vmem:[%s5 + $0xa8] sm:$0xff]
  %v1052 = vld [vmem:[%s5 + $0xb0] sm:$0xff]
  %v1053 = vld [vmem:[%s5 + $0xb8] sm:$0xff]
  %v1054 = vld [vmem:[%s5 + $0xc0] sm:$0xff]
  %v1055 = vld [vmem:[%s5 + $0xc8] sm:$0xff]
  %v1056 = vld [vmem:[%s5 + $0xd0] sm:$0xff]
  %v1057 = vld [vmem:[%s5 + $0xd8] sm:$0xff]
  %v1058 = vld [vmem:[%s5 + $0xe0] sm:$0xff]
  %v1059 = vld [vmem:[%s5 + $0xe8] sm:$0xff]
  %v1060 = vld [vmem:[%s5 + $0xf0] sm:$0xff]
  %v1061 = vld [vmem:[%s5 + $0xf8] sm:$0xff]
  %v1062 = vld [vmem:[%s5 + $0x100] sm:$0xff]
  %v1063 = vld [vmem:[%s5 + $0x108] sm:$0xff]
  %v1064 = vld [vmem:[%s5 + $0x110] sm:$0xff]
  %v1065 = vld [vmem:[%s5 + $0x118] sm:$0xff]
  %v1066 = vld [vmem:[%s5 + $0x120] sm:$0xff]
  %v1067 = vld [vmem:[%s5 + $0x128] sm:$0xff]
  %v1068 = vld [vmem:[%s5 + $0x130] sm:$0xff]
  %v1069 = vld [vmem:[%s5 + $0x138] sm:$0xff]
  %v1070 = vld [vmem:[%s5 + $0x140] sm:$0xff]
  %v1071 = vld [vmem:[%s5 + $0x148] sm:$0xff]
  %v1072 = vld [vmem:[%s5 + $0x150] sm:$0xff]
  %v1073 = vld [vmem:[%s5 + $0x158] sm:$0xff]
  %v1074 = vld [vmem:[%s5 + $0x160] sm:$0xff]
  %v1075 = vld [vmem:[%s5 + $0x168] sm:$0xff]
  %v1076 = vld [vmem:[%s5 + $0x170] sm:$0xff]
  %v1077 = vld [vmem:[%s5 + $0x178] sm:$0xff]
  %1078 = vmatprep.subr.mxu0 0.0
  %1079 = vmatpush1.msra.mxu0 %v1045
  %1080 = vmatprep.subr.mxu0 0.0
  %1081 = vmatpush1.msra.mxu0 %v1044
  %1082 = vmatprep.subr.mxu0 0.0
  %1083 = vmatpush1.msra.mxu0 %v1043
  %1084 = vmatprep.subr.mxu0 0.0
  %1085 = vmatpush1.msra.mxu0 %v1042
  %1086 = vmatprep.subr.mxu0 0.0
  %1087 = vmatpush1.msra.mxu0 %v1041
  %1088 = vmatprep.subr.mxu0 0.0
  %1089 = vmatpush1.msra.mxu0 %v1040
  %1090 = vmatprep.subr.mxu0 0.0
  %1091 = vmatpush1.msra.mxu0 %v1039
  %1092 = vmatprep.subr.mxu0 0.0
  %1093 = vmatpush1.msra.mxu0 %v1038
  %1094 = vmatprep.subr.mxu0 0.0
  %1095 = vmatpush1.msra.mxu0 %v1037
  %1096 = vmatprep.subr.mxu0 0.0
  %1097 = vmatpush1.msra.mxu0 %v1036
  %1098 = vmatprep.subr.mxu0 0.0
  %1099 = vmatpush1.msra.mxu0 %v1035
  %1100 = vmatprep.subr.mxu0 0.0
  %1101 = vmatpush1.msra.mxu0 %v1034
  %1102 = vmatprep.subr.mxu0 0.0
  %1103 = vmatpush1.msra.mxu0 %v1033
  %1104 = vmatprep.subr.mxu0 0.0
  %1105 = vmatpush1.msra.mxu0 %v1032
  %1106 = vmatprep.subr.mxu0 0.0
  %1107 = vmatpush1.msra.mxu0 %v1031
  %1108 = vmatprep.subr.mxu0 0.0
  %1109 = vmatpush1.msra.mxu0 %v1030
  %1110 = vmatprep.subr.mxu0 0.0
  %1111 = vmatpush2.msra.mxu0 %v1061
  %1112 = vmatprep.subr.mxu0 0.0
  %1113 = vmatpush2.msra.mxu0 %v1060
  %1114 = vmatprep.subr.mxu0 0.0
  %1115 = vmatpush2.msra.mxu0 %v1059
  %1116 = vmatprep.subr.mxu0 0.0
  %1117 = vmatpush2.msra.mxu0 %v1058
  %1118 = vmatprep.subr.mxu0 0.0
  %1119 = vmatpush2.msra.mxu0 %v1057
  %1120 = vmatprep.subr.mxu0 0.0
  %1121 = vmatpush2.msra.mxu0 %v1056
  %1122 = vmatprep.subr.mxu0 0.0
  %1123 = vmatpush2.msra.mxu0 %v1055
  %1124 = vmatprep.subr.mxu0 0.0
  %1125 = vmatpush2.msra.mxu0 %v1054
  %1126 = vmatprep.subr.mxu0 0.0
  %1127 = vmatpush2.msra.mxu0 %v1053
  %1128 = vmatprep.subr.mxu0 0.0
  %1129 = vmatpush2.msra.mxu0 %v1052
  %1130 = vmatprep.subr.mxu0 0.0
  %1131 = vmatpush2.msra.mxu0 %v1051
  %1132 = vmatprep.subr.mxu0 0.0
  %1133 = vmatpush2.msra.mxu0 %v1050
  %1134 = vmatprep.subr.mxu0 0.0
  %1135 = vmatpush2.msra.mxu0 %v1049
  %1136 = vmatprep.subr.mxu0 0.0
  %1137 = vmatpush2.msra.mxu0 %v1048
  %1138 = vmatprep.subr.mxu0 0.0
  %1139 = vmatpush2.msra.mxu0 %v1047
  %1140 = vmatprep.subr.mxu0 0.0
  %1141 = vmatpush2.msra.mxu0 %v1046
  %1142 = vmatprep.mubr.f32.mxu0 %v871
  %1143 = vmatmul.mubr.f32.gmra.mxu0 %v726
  %v1144 = vpop.f32.mrf.mxu0
  %v1145 = vadd.f32 0.0, %v1144
  %v1146 = vpop.f32.mrf.mxu0
  %1147 = vmatprep.mubr.f32.mxu0 %v876
  %1148 = vmatmul.mubr.f32.gmra.mxu0 %v731
  %v1149 = vpop.f32.mrf.mxu0
  %v1150 = vadd.f32 0.0, %v1149
  %v1151 = vpop.f32.mrf.mxu0
  %1152 = vmatprep.mubr.f32.mxu0 %v881
  %1153 = vmatmul.mubr.f32.gmra.mxu0 %v736
  %v1154 = vpop.f32.mrf.mxu0
  %v1155 = vadd.f32 0.0, %v1154
  %v1156 = vpop.f32.mrf.mxu0
  %1157 = vmatprep.mubr.f32.mxu0 %v886
  %1158 = vmatmul.mubr.f32.gmra.mxu0 %v741
  %v1159 = vpop.f32.mrf.mxu0
  %v1160 = vadd.f32 0.0, %v1159
  %v1161 = vpop.f32.mrf.mxu0
  %1162 = vdwg.mxu0
  %1163 = vmatprep.subr.mxu0 0.0
  %1164 = vmatpush1.msra.mxu0 %v1077
  %1165 = vmatprep.subr.mxu0 0.0
  %1166 = vmatpush1.msra.mxu0 %v1076
  %1167 = vmatprep.subr.mxu0 0.0
  %1168 = vmatpush1.msra.mxu0 %v1075
  %1169 = vmatprep.subr.mxu0 0.0
  %1170 = vmatpush1.msra.mxu0 %v1074
  %1171 = vmatprep.subr.mxu0 0.0
  %1172 = vmatpush1.msra.mxu0 %v1073
  %1173 = vmatprep.subr.mxu0 0.0
  %1174 = vmatpush1.msra.mxu0 %v1072
  %1175 = vmatprep.subr.mxu0 0.0
  %1176 = vmatpush1.msra.mxu0 %v1071
  %1177 = vmatprep.subr.mxu0 0.0
  %1178 = vmatpush1.msra.mxu0 %v1070
  %1179 = vmatprep.subr.mxu0 0.0
  %1180 = vmatpush1.msra.mxu0 %v1069
  %1181 = vmatprep.subr.mxu0 0.0
  %1182 = vmatpush1.msra.mxu0 %v1068
  %1183 = vmatprep.subr.mxu0 0.0
  %1184 = vmatpush1.msra.mxu0 %v1067
  %1185 = vmatprep.subr.mxu0 0.0
  %1186 = vmatpush1.msra.mxu0 %v1066
  %1187 = vmatprep.subr.mxu0 0.0
  %1188 = vmatpush1.msra.mxu0 %v1065
  %1189 = vmatprep.subr.mxu0 0.0
  %1190 = vmatpush1.msra.mxu0 %v1064
  %1191 = vmatprep.subr.mxu0 0.0
  %1192 = vmatpush1.msra.mxu0 %v1063
  %1193 = vmatprep.subr.mxu0 0.0
  %1194 = vmatpush1.msra.mxu0 %v1062
  %1195 = vmatprep.subr.mxu0 0.0
  %1196 = vmatpush2.msra.mxu0 0.0
  %1197 = vmatprep.subr.mxu0 0.0
  %1198 = vmatpush2.msra.mxu0 0.0
  %1199 = vmatprep.subr.mxu0 0.0
  %1200 = vmatpush2.msra.mxu0 0.0
  %1201 = vmatprep.subr.mxu0 0.0
  %1202 = vmatpush2.msra.mxu0 0.0
  %1203 = vmatprep.subr.mxu0 0.0
  %1204 = vmatpush2.msra.mxu0 0.0
  %1205 = vmatprep.subr.mxu0 0.0
  %1206 = vmatpush2.msra.mxu0 0.0
  %1207 = vmatprep.subr.mxu0 0.0
  %1208 = vmatpush2.msra.mxu0 0.0
  %1209 = vmatprep.subr.mxu0 0.0
  %1210 = vmatpush2.msra.mxu0 0.0
  %1211 = vmatprep.subr.mxu0 0.0
  %1212 = vmatpush2.msra.mxu0 0.0
  %1213 = vmatprep.subr.mxu0 0.0
  %1214 = vmatpush2.msra.mxu0 0.0
  %1215 = vmatprep.subr.mxu0 0.0
  %1216 = vmatpush2.msra.mxu0 0.0
  %1217 = vmatprep.subr.mxu0 0.0
  %1218 = vmatpush2.msra.mxu0 0.0
  %1219 = vmatprep.subr.mxu0 0.0
  %1220 = vmatpush2.msra.mxu0 0.0
  %1221 = vmatprep.subr.mxu0 0.0
  %1222 = vmatpush2.msra.mxu0 0.0
  %1223 = vmatprep.subr.mxu0 0.0
  %1224 = vmatpush2.msra.mxu0 0.0
  %1225 = vmatprep.subr.mxu0 0.0
  %1226 = vmatpush2.msra.mxu0 0.0
  %1227 = vmatprep.mubr.f32.mxu0 0.0
  %1228 = vmatmul.mubr.f32.gmra.mxu0 %v1012
  %v1229 = vpop.f32.mrf.mxu0
  %v1230 = vadd.f32 %v1145, %v1229
  %v1231 = vpop.f32.mrf.mxu0
  %1232 = vmatprep.mubr.f32.mxu0 0.0
  %1233 = vmatmul.mubr.f32.gmra.mxu0 %v1017
  %v1234 = vpop.f32.mrf.mxu0
  %v1235 = vadd.f32 %v1150, %v1234
  %v1236 = vpop.f32.mrf.mxu0
  %1237 = vmatprep.mubr.f32.mxu0 0.0
  %1238 = vmatmul.mubr.f32.gmra.mxu0 %v1022
  %v1239 = vpop.f32.mrf.mxu0
  %v1240 = vadd.f32 %v1155, %v1239
  %v1241 = vpop.f32.mrf.mxu0
  %1242 = vmatprep.mubr.f32.mxu0 0.0
  %1243 = vmatmul.mubr.f32.gmra.mxu0 %v1027
  %v1244 = vpop.f32.mrf.mxu0
  %v1245 = vadd.f32 %v1160, %v1244
  %v1246 = vpop.f32.mrf.mxu0
  %1247 = vdwg.mxu0
  %v1248 = vld [vmem:[%s6] sm:$0x1]
  %v1250 = vlaneseq
  %v1251 = vshrl.u32 %v1250, 7
  %v1252 = vsub.s32 0, %v1251
  %v1253 = vrot.slane %v1248, %v1252
  %v1255 = vmul.f32 %v1230, %v1253
  %v1256 = vmul.f32 %v1235, %v1253
  %v1257 = vmul.f32 %v1240, %v1253
  %v1258 = vmul.f32 %v1245, %v1253
  %v1259 = vld [vmem:[%s7] sm:$0x1]
  %v1261 = vlaneseq
  %v1262 = vshrl.u32 %v1261, 7
  %v1263 = vsub.s32 0, %v1262
  %v1264 = vrot.slane %v1259, %v1263
  %v1266 = vadd.f32 %v1255, %v1264
  %v1267 = vadd.f32 %v1256, %v1264
  %v1268 = vadd.f32 %v1257, %v1264
  %v1269 = vadd.f32 %v1258, %v1264
  %v1270 = vadd.f32 %v1266, %v29
  %v1271 = vadd.f32 %v1267, %v30
  %v1272 = vadd.f32 %v1268, %v31
  %v1273 = vadd.f32 %v1269, %v32
  %v1274 = vmax.f32 %v1270, 0.0
  %v1275 = vmax.f32 %v1271, 0.0
  %v1276 = vmax.f32 %v1272, 0.0
  %v1277 = vmax.f32 %v1273, 0.0
  %1278 = vst [vmem:[%s8] sm:$0xff] %v1274
  %1279 = vst [vmem:[%s8 + $0x8] sm:$0xff] %v1275
  %1280 = vst [vmem:[%s8 + $0x10] sm:$0xff] %v1276
  %1281 = vst [vmem:[%s8 + $0x18] sm:$0xff] %v1277
  // Predicated region
  $region34: #{unit_gcn_pallas.1} parent=0 // pred_check
    _
  $region35: #{unit_gcn_pallas.1} parent=0 // pred_check_branch
    %1283 = sbr.rel (0) target = $region37
  $region36: #{unit_gcn_pallas.1} parent=0 // pred_region
    _
  $region37: #{unit_gcn_pallas.1} parent=0 // pred_fallthru
    _
  // Predicated region
  $region38: #{unit_gcn_pallas.1} parent=0 // pred_check
    _
  $region39: #{unit_gcn_pallas.1} parent=0 // pred_check_branch
    %1285 = sbr.rel (0) target = $region41
  $region40: #{unit_gcn_pallas.1} parent=0 // pred_region
    _
  $region41: #{unit_gcn_pallas.1} parent=0 // pred_fallthru
    _

</llo_original>
